<compile_context>
chip_gen: v7x
topology: tpu7x:2x2x1
jax: 0.10.0
libtpu: 0.0.40
codegen_flags: <defaults>
</compile_context>

<pallas_src>
import functools

import jax
import jax.numpy as jnp
from jax.experimental import pallas as pl
from jax.experimental.pallas import tpu as pltpu


def _round_up(x, m):
    return (x + m - 1) // m * m


# ------------------------------------------------------------------
# Host-side weight / mask preprocessing
# ------------------------------------------------------------------
def _fused_conv_weight(w, splits, pads):
    """OIHW conv weight (Cout, Cin, k, k) -> (Cout_pad16, K_pad16) bf16 matrix.

    Column order is [input-part, tap, channel] so it matches the in-kernel stack
    built by concatenating, per input part, the k*k shifted views (channel padding
    of a part inserts zero columns). Cout / K are zero-padded to multiples of 16 so
    both bf16 MXU operands are tile-aligned.
    """
    cout, _, k, _ = w.shape
    blocks, start = [], 0
    for c, p in zip(splits, pads):
        wp = w[:, start:start + c]
        if p > c:
            wp = jnp.pad(wp, ((0, 0), (0, p - c), (0, 0), (0, 0)))
        # (Cout, p, k, k) -> (Cout, k, k, p) -> (Cout, k*k*p): col = tap*p + ch
        blocks.append(wp.transpose(0, 2, 3, 1).reshape(cout, k * k * p))
        start += c
    m = jnp.concatenate(blocks, axis=1)
    ktot = m.shape[1]
    m = jnp.pad(m, ((0, _round_up(cout, 16) - cout),
                    (0, _round_up(ktot, 16) - ktot)))
    return m.astype(jnp.bfloat16)


def _tap_masks(k, B, H, W):
    """Per-tap lane-validity masks (conv zero padding), shape (k*k, B*H*W) f32."""
    N, HW, r = B * H * W, H * W, k // 2
    col = jnp.arange(N, dtype=jnp.int32)
    yy, xx = (col % HW) // W, col % W
    rows = []
    for o in range(k * k):
        dy, dx = o // k - r, o % k - r
        rows.append(((yy + dy >= 0) & (yy + dy < H) &
                     (xx + dx >= 0) & (xx + dx < W)).astype(jnp.float32))
    return jnp.stack(rows, axis=0)


# ------------------------------------------------------------------
# Fused decoder-step kernel (built per static config)
# ------------------------------------------------------------------
def _build_decoder_kernel(B, H, W, hidden_size, kernel_size, distinct_ks):
    N = B * H * W
    L = len(hidden_size)
    M = len(distinct_ks)
    k0 = kernel_size[0]
    h0 = hidden_size[0]
    f32 = jnp.float32
    n_in = 1 + L + 1 + M + 4 + 4 * L + 2

    def kernel(*refs):
        in_refs, out_refs = refs[:n_in], refs[n_in:]
        x_ref = in_refs[0]
        h_refs = in_refs[1:1 + L]
        enc_ref = in_refs[1 + L]
        base = 2 + L
        mask_refs = {k: in_refs[base + i] for i, k in enumerate(distinct_ks)}
        base += M
        attn_w_ref, attn_b_ref, comb_w_ref, comb_b_ref = in_refs[base:base + 4]
        base += 4
        gru_refs = in_refs[base:base + 4 * L]
        base += 4 * L
        pre_w_ref, pre_b_ref = in_refs[base:base + 2]

        out_ref = out_refs[0]
        hn_refs = out_refs[1:1 + L]
        attnw_ref = out_refs[1 + L]

        zrow8 = jnp.zeros((8, N), f32)   # contraction padding rows (K -> mult of 16)

        def shifted(act, k):
            """k*k shifted + boundary-masked views of a (C, N) activation."""
            r, m_ref, views = k // 2, mask_refs[k], []
            for o in range(k * k):
                dy, dx = o // k - r, o % k - r
                if dy == 0 and dx == 0:
                    views.append(act)                     # center tap: no roll/mask
                else:
                    sh = (-(dy * W + dx)) % N
                    views.append(pltpu.roll(act, sh, axis=1)
                                 * m_ref[pl.ds(o, 1), :])
            return views

        def conv(view_lists, w_ref, b_ref, cout):
            """ONE fused MXU matmul per conv: all taps of all input parts stacked
            along the contraction axis, bf16 operands, f32 accumulate."""
            parts = [v for vs in view_lists for v in vs]
            ktot = sum(int(v.shape[0]) for v in parts)
            kpad = int(w_ref.shape[1])
            assert 0 <= kpad - ktot <= 8
            if kpad > ktot:
                parts.append(zrow8[:kpad - ktot, :])
            stack = jnp.concatenate(parts, axis=0).astype(jnp.bfloat16)
            acc = jnp.dot(w_ref[...], stack, preferred_element_type=f32)
            return acc[:cout, :] + b_ref[...]

        x = x_ref[...]
        hs = [h_refs[l][...] for l in range(L)]   # read BEFORE any aliased hn write

        x_v = shifted(x, k0)          # reused by attn and attn_combine
        h0_v = shifted(hs[0], k0)     # reused by attn and GRU layer 0 gates

        # attention conv + softmax over channels
        a = conv([x_v, h0_v], attn_w_ref, attn_b_ref, 2 * h0)
        a = a - jnp.max(a, axis=0, keepdims=True)
        e = jnp.exp(a)
        attn_w = e * pl.reciprocal(jnp.sum(e, axis=0, keepdims=True), approx=False)
        attnw_ref[...] = attn_w

        # TODO(synk): torch.bmm on a 4-D tensor is invalid in the reference; we flatten
        # (H, W) -> H*W, so the per-batch bmm is one matmul vs block-diagonal enc.
        attn_applied = jnp.dot(attn_w.astype(jnp.bfloat16), enc_ref[...],
                               preferred_element_type=f32)

        # attn_combine + ReLU
        comb = conv([x_v, shifted(attn_applied, k0)], comb_w_ref, comb_b_ref, 2 * h0)
        layer_in = jnp.maximum(comb, 0.0)

        # TODO(synk): ConvGRU is not defined in the reference source; implemented as a
        # conv-gated GRU (update/reset gates + tanh candidate, reset applied to h_prev
        # before the candidate conv) — same formulation as the previous kernel.
        for l in range(L):
            wg_ref, bg_ref, wc_ref, bc_ref = gru_refs[4 * l:4 * l + 4]
            k, ch = kernel_size[l], hidden_size[l]
            h_prev = hs[l]
            li_v = shifted(layer_in, k)
            hp_v = h0_v if l == 0 else shifted(h_prev, k)
            g = conv([li_v, hp_v], wg_ref, bg_ref, 2 * ch)
            z = jax.nn.sigmoid(g[:ch, :])
            r_gate = jax.nn.sigmoid(g[ch:, :])
            c = conv([li_v, shifted(r_gate * h_prev, k)], wc_ref, bc_ref, ch)
            h_new = (1.0 - z) * h_prev + z * jnp.tanh(c)
            hn_refs[l][...] = h_new
            layer_in = h_new

        # conv_pre applied twice (ReLU only in between), weights reused from VMEM.
        pre_ch = out_ref.shape[0]
        p = conv([shifted(layer_in, 3)], pre_w_ref, pre_b_ref, pre_ch)
        p = jnp.maximum(p, 0.0)
        out_ref[...] = conv([shifted(p, 3)], pre_w_ref, pre_b_ref, pre_ch)

    return kernel, n_in


# ------------------------------------------------------------------
# Parameter init (deterministic, PyTorch-like uniform(-1/sqrt(fan_in), +))
# ------------------------------------------------------------------
def _uniform(key, shape, fan_in):
    bound = 1.0 / float(fan_in) ** 0.5
    return jax.random.uniform(key, shape, jnp.float32, -bound, bound)


def init_params(key, hidden_size, output_size, kernel_size):
    h0, k0 = hidden_size[0], kernel_size[0]
    keys = jax.random.split(key, 8 + 4 * len(hidden_size))
    p = {}
    cin = output_size + h0
    p["attn_w"] = _uniform(keys[0], (2 * h0, cin, k0, k0), cin * k0 * k0)
    p["attn_b"] = _uniform(keys[1], (2 * h0,), cin * k0 * k0)
    # TODO(synk): reference __init__ declares attn_combine in_channels = output_size +
    # hidden_size[0], but its own forward feeds output_size + 2*hidden_size[0] channels;
    # we follow the forward data flow.
    cin_c = output_size + 2 * h0
    p["comb_w"] = _uniform(keys[2], (2 * h0, cin_c, k0, k0), cin_c * k0 * k0)
    p["comb_b"] = _uniform(keys[3], (2 * h0,), cin_c * k0 * k0)
    gru, cx, ki = [], 2 * h0, 4
    for ch, k in zip(hidden_size, kernel_size):
        cin_g = cx + ch
        gru.append(dict(
            wg=_uniform(keys[ki + 0], (2 * ch, cin_g, k, k), cin_g * k * k),
            bg=_uniform(keys[ki + 1], (2 * ch,), cin_g * k * k),
            wc=_uniform(keys[ki + 2], (ch, cin_g, k, k), cin_g * k * k),
            bc=_uniform(keys[ki + 3], (ch,), cin_g * k * k)))
        ki += 4
        cx = ch
    p["gru"] = gru
    hin = hidden_size[-1]
    p["pre_w"] = _uniform(keys[ki + 0], (8, hin, 3, 3), hin * 9)
    p["pre_b"] = _uniform(keys[ki + 1], (8,), hin * 9)
    # conv_pre1 is declared in the reference __init__ but never used in forward.
    p["pre1_w"] = _uniform(keys[ki + 2], (output_size, 8, 1, 1), 8)
    p["pre1_b"] = _uniform(keys[ki + 3], (output_size,), 8)
    return p


# ------------------------------------------------------------------
# Forward pass (AttnDecoderRNN.forward) — single fused pallas_call
# ------------------------------------------------------------------
def attn_decoder_forward(params, inputs, hiddens, encoder_outputs, kernel_size):
    B, Cx, H, W = inputs.shape
    hidden_size = tuple(int(h.shape[1]) for h in hiddens)
    kernel_size = tuple(kernel_size)
    L = len(hidden_size)
    N, HW = B * H * W, H * W
    h0 = hidden_size[0]
    f32, bf16 = jnp.float32, jnp.bfloat16

    assert N % 128 == 0, "lane-dense layout requires B*H*W to be a multiple of 128"
    assert all(c % 8 == 0 for c in hidden_size), "hidden channels must be sublane-aligned"

    def to_lanes(a):                        # (B, C, H, W) -> (C, B*H*W), lane-dense
        return a.transpose(1, 0, 2, 3).reshape(a.shape[1], N).astype(f32)

    def from_lanes(a, c):                   # (C, B*H*W) -> (B, C, H, W)
        return a.reshape(c, B, H, W).transpose(1, 0, 2, 3)

    def bias(b, cout):                      # pre-broadcast bias -> (Cout, 128 lanes)
        return jnp.broadcast_to(b.astype(f32).reshape(-1, 1), (cout, N))

    # TODO(synk): nn.Dropout(p=0.1) applied as eval-mode identity (deterministic).
    cxp = _round_up(Cx, 8)                  # pad input channels to a sublane multiple
    x2 = jnp.pad(to_lanes(inputs), ((0, cxp - Cx), (0, 0)))
    h2 = [to_lanes(h) for h in hiddens]

    # Block-diagonal encoder_outputs (bf16): one lane-dense matmul == per-batch bmm.
    # TODO(synk): O(N^2) buffer — at larger B*H*W switch to per-batch (C,HW)@(HW,HW).
    enc_bd = jnp.zeros((N, N), f32)
    for b in range(B):
        enc_bd = enc_bd.at[b * HW:(b + 1) * HW, b * HW:(b + 1) * HW].set(
            encoder_outputs[b].astype(f32))
    enc_bd = enc_bd.astype(bf16)

    distinct_ks = tuple(sorted(set(list(kernel_size) + [3])))
    masks = [_tap_masks(k, B, H, W) for k in distinct_ks]

    attn_w = _fused_conv_weight(params["attn_w"], [Cx, h0], [cxp, h0])
    comb_w = _fused_conv_weight(params["comb_w"], [Cx, 2 * h0], [cxp, 2 * h0])

    gru_args, cx = [], 2 * h0
    for l, lp in enumerate(params["gru"]):
        ch = hidden_size[l]
        gru_args += [_fused_conv_weight(lp["wg"], [cx, ch], [cx, ch]),
                     bias(lp["bg"], 2 * ch),
                     _fused_conv_weight(lp["wc"], [cx, ch], [cx, ch]),
                     bias(lp["bc"], ch)]
        cx = ch

    pre_ch = params["pre_w"].shape[0]       # = 8
    pre_w = _fused_conv_weight(params["pre_w"], [hidden_size[-1]], [hidden_size[-1]])

    args = ([x2] + h2 + [enc_bd] + masks +
            [attn_w, bias(params["attn_b"], 2 * h0),
             comb_w, bias(params["comb_b"], 2 * h0)] +
            gru_args +
            [pre_w, bias(params["pre_b"], pre_ch)])

    kernel, n_in = _build_decoder_kernel(B, H, W, hidden_size, kernel_size,
                                         distinct_ks)
    assert len(args) == n_in

    out_shape = tuple(
        [jax.ShapeDtypeStruct((pre_ch, N), f32)]
        + [jax.ShapeDtypeStruct((hidden_size[l], N), f32) for l in range(L)]
        + [jax.ShapeDtypeStruct((2 * h0, N), f32)])

    vmem = pl.BlockSpec(memory_space=pltpu.MemorySpace.VMEM)
    outs = pl.pallas_call(
        kernel,
        out_shape=out_shape,
        in_specs=[vmem] * n_in,
        out_specs=tuple([vmem] * len(out_shape)),
        # write each new hidden state back over its input buffer (read-before-write
        # ordering is guaranteed by the h_prev -> h_new data dependence)
        input_output_aliases={1 + l: 1 + l for l in range(L)},
    )(*args)

    out = from_lanes(outs[0], pre_ch)
    new_hiddens = [from_lanes(outs[1 + l], hidden_size[l]) for l in range(L)]
    attn_weights = from_lanes(outs[1 + L], 2 * h0)
    return out, new_hiddens, attn_weights


# ------------------------------------------------------------------
if __name__ == "__main__":
    B, H, W = 2, 8, 8
    output_size = 4
    hidden_size = [8, 8]   # hidden_size[-1] == 8 so conv_pre(conv_pre(.)) is shape-consistent
    kernel_size = [3, 3]

    key = jax.random.PRNGKey(0)
    kp, k1, k2, k3, k4 = jax.random.split(key, 5)
    params = init_params(kp, hidden_size, output_size, kernel_size)

    x = jax.random.normal(k1, (B, output_size, H, W), jnp.float32)
    hiddens = [jax.random.normal(k2, (B, hidden_size[0], H, W), jnp.float32),
               jax.random.normal(k3, (B, hidden_size[1], H, W), jnp.float32)]
    encoder_outputs = jax.random.normal(k4, (B, H * W, H * W), jnp.float32)

    fwd = jax.jit(functools.partial(attn_decoder_forward,
                                    kernel_size=tuple(kernel_size)))
    out, new_hiddens, attn_w = fwd(params, x, hiddens, encoder_outputs)
    jax.block_until_ready((out, new_hiddens, attn_w))

    assert out.shape == (B, 8, H, W)
    assert attn_w.shape == (B, 2 * hidden_size[0], H, W)
    assert all(nh.shape == (B, c, H, W) for nh, c in zip(new_hiddens, hidden_size))
    print("KERNEL_OK")
</pallas_src>

<mosaic_0001>
module attributes {stable_mosaic.version = 11 : i64} {
  func.func @kernel(%arg0: memref<8x128xf32, #tpu.memory_space<vmem>>, %arg1: memref<8x128xf32, #tpu.memory_space<vmem>>, %arg2: memref<8x128xf32, #tpu.memory_space<vmem>>, %arg3: memref<128x128xbf16, #tpu.memory_space<vmem>>, %arg4: memref<9x128xf32, #tpu.memory_space<vmem>>, %arg5: memref<16x144xbf16, #tpu.memory_space<vmem>>, %arg6: memref<16x128xf32, #tpu.memory_space<vmem>>, %arg7: memref<16x224xbf16, #tpu.memory_space<vmem>>, %arg8: memref<16x128xf32, #tpu.memory_space<vmem>>, %arg9: memref<16x224xbf16, #tpu.memory_space<vmem>>, %arg10: memref<16x128xf32, #tpu.memory_space<vmem>>, %arg11: memref<16x224xbf16, #tpu.memory_space<vmem>>, %arg12: memref<8x128xf32, #tpu.memory_space<vmem>>, %arg13: memref<16x144xbf16, #tpu.memory_space<vmem>>, %arg14: memref<16x128xf32, #tpu.memory_space<vmem>>, %arg15: memref<16x144xbf16, #tpu.memory_space<vmem>>, %arg16: memref<8x128xf32, #tpu.memory_space<vmem>>, %arg17: memref<16x80xbf16, #tpu.memory_space<vmem>>, %arg18: memref<8x128xf32, #tpu.memory_space<vmem>>, %arg19: memref<8x128xf32, #tpu.memory_space<vmem>>, %arg20: memref<8x128xf32, #tpu.memory_space<vmem>>, %arg21: memref<8x128xf32, #tpu.memory_space<vmem>>, %arg22: memref<16x128xf32, #tpu.memory_space<vmem>>) attributes {dimension_semantics = [], scalar_prefetch = 0 : i64, scratch_operands = 0 : i64, tpu.core_type = #tpu.core_type<tc>} {
    %cst = arith.constant 0.000000e+00 : f32
    %0 = vector.broadcast %cst : f32 to vector<8x128xf32>
    %c0 = arith.constant 0 : index
    %c0_0 = arith.constant 0 : index
    %1 = vector.load %arg0[%c0, %c0_0] : memref<8x128xf32, #tpu.memory_space<vmem>>, vector<8x128xf32>
    %c0_1 = arith.constant 0 : index
    %c0_2 = arith.constant 0 : index
    %2 = vector.load %arg1[%c0_1, %c0_2] : memref<8x128xf32, #tpu.memory_space<vmem>>, vector<8x128xf32>
    %c0_3 = arith.constant 0 : index
    %c0_4 = arith.constant 0 : index
    %3 = vector.load %arg2[%c0_3, %c0_4] : memref<8x128xf32, #tpu.memory_space<vmem>>, vector<8x128xf32>
    %c9_i32 = arith.constant 9 : i32
    %4 = tpu.dynamic_rotate %1 by %c9_i32 dim 1 : vector<8x128xf32>, i32 -> vector<8x128xf32>
    %c0_5 = arith.constant 0 : index
    %c0_6 = arith.constant 0 : index
    %5 = vector.load %arg4[%c0_5, %c0_6] : memref<9x128xf32, #tpu.memory_space<vmem>>, vector<1x128xf32>
    %6 = vector.broadcast %5 : vector<1x128xf32> to vector<8x128xf32>
    %7 = arith.mulf %4, %6 : vector<8x128xf32>
    %c8_i32 = arith.constant 8 : i32
    %8 = tpu.dynamic_rotate %1 by %c8_i32 dim 1 : vector<8x128xf32>, i32 -> vector<8x128xf32>
    %c1 = arith.constant 1 : index
    %c0_7 = arith.constant 0 : index
    %9 = vector.load %arg4[%c1, %c0_7] : memref<9x128xf32, #tpu.memory_space<vmem>>, vector<1x128xf32>
    %10 = vector.broadcast %9 : vector<1x128xf32> to vector<8x128xf32>
    %11 = arith.mulf %8, %10 : vector<8x128xf32>
    %c7_i32 = arith.constant 7 : i32
    %12 = tpu.dynamic_rotate %1 by %c7_i32 dim 1 : vector<8x128xf32>, i32 -> vector<8x128xf32>
    %c2 = arith.constant 2 : index
    %c0_8 = arith.constant 0 : index
    %13 = vector.load %arg4[%c2, %c0_8] : memref<9x128xf32, #tpu.memory_space<vmem>>, vector<1x128xf32>
    %14 = vector.broadcast %13 : vector<1x128xf32> to vector<8x128xf32>
    %15 = arith.mulf %12, %14 : vector<8x128xf32>
    %c1_i32 = arith.constant 1 : i32
    %16 = tpu.dynamic_rotate %1 by %c1_i32 dim 1 : vector<8x128xf32>, i32 -> vector<8x128xf32>
    %c3 = arith.constant 3 : index
    %c0_9 = arith.constant 0 : index
    %17 = vector.load %arg4[%c3, %c0_9] : memref<9x128xf32, #tpu.memory_space<vmem>>, vector<1x128xf32>
    %18 = vector.broadcast %17 : vector<1x128xf32> to vector<8x128xf32>
    %19 = arith.mulf %16, %18 : vector<8x128xf32>
    %c127_i32 = arith.constant 127 : i32
    %20 = tpu.dynamic_rotate %1 by %c127_i32 dim 1 : vector<8x128xf32>, i32 -> vector<8x128xf32>
    %c5 = arith.constant 5 : index
    %c0_10 = arith.constant 0 : index
    %21 = vector.load %arg4[%c5, %c0_10] : memref<9x128xf32, #tpu.memory_space<vmem>>, vector<1x128xf32>
    %22 = vector.broadcast %21 : vector<1x128xf32> to vector<8x128xf32>
    %23 = arith.mulf %20, %22 : vector<8x128xf32>
    %c121_i32 = arith.constant 121 : i32
    %24 = tpu.dynamic_rotate %1 by %c121_i32 dim 1 : vector<8x128xf32>, i32 -> vector<8x128xf32>
    %c6 = arith.constant 6 : index
    %c0_11 = arith.constant 0 : index
    %25 = vector.load %arg4[%c6, %c0_11] : memref<9x128xf32, #tpu.memory_space<vmem>>, vector<1x128xf32>
    %26 = vector.broadcast %25 : vector<1x128xf32> to vector<8x128xf32>
    %27 = arith.mulf %24, %26 : vector<8x128xf32>
    %c120_i32 = arith.constant 120 : i32
    %28 = tpu.dynamic_rotate %1 by %c120_i32 dim 1 : vector<8x128xf32>, i32 -> vector<8x128xf32>
    %c7 = arith.constant 7 : index
    %c0_12 = arith.constant 0 : index
    %29 = vector.load %arg4[%c7, %c0_12] : memref<9x128xf32, #tpu.memory_space<vmem>>, vector<1x128xf32>
    %30 = vector.broadcast %29 : vector<1x128xf32> to vector<8x128xf32>
    %31 = arith.mulf %28, %30 : vector<8x128xf32>
    %c119_i32 = arith.constant 119 : i32
    %32 = tpu.dynamic_rotate %1 by %c119_i32 dim 1 : vector<8x128xf32>, i32 -> vector<8x128xf32>
    %c8 = arith.constant 8 : index
    %c0_13 = arith.constant 0 : index
    %33 = vector.load %arg4[%c8, %c0_13] : memref<9x128xf32, #tpu.memory_space<vmem>>, vector<1x128xf32>
    %34 = vector.broadcast %33 : vector<1x128xf32> to vector<8x128xf32>
    %35 = arith.mulf %32, %34 : vector<8x128xf32>
    %c9_i32_14 = arith.constant 9 : i32
    %36 = tpu.dynamic_rotate %2 by %c9_i32_14 dim 1 : vector<8x128xf32>, i32 -> vector<8x128xf32>
    %c0_15 = arith.constant 0 : index
    %c0_16 = arith.constant 0 : index
    %37 = vector.load %arg4[%c0_15, %c0_16] : memref<9x128xf32, #tpu.memory_space<vmem>>, vector<1x128xf32>
    %38 = vector.broadcast %37 : vector<1x128xf32> to vector<8x128xf32>
    %39 = arith.mulf %36, %38 : vector<8x128xf32>
    %c8_i32_17 = arith.constant 8 : i32
    %40 = tpu.dynamic_rotate %2 by %c8_i32_17 dim 1 : vector<8x128xf32>, i32 -> vector<8x128xf32>
    %c1_18 = arith.constant 1 : index
    %c0_19 = arith.constant 0 : index
    %41 = vector.load %arg4[%c1_18, %c0_19] : memref<9x128xf32, #tpu.memory_space<vmem>>, vector<1x128xf32>
    %42 = vector.broadcast %41 : vector<1x128xf32> to vector<8x128xf32>
    %43 = arith.mulf %40, %42 : vector<8x128xf32>
    %c7_i32_20 = arith.constant 7 : i32
    %44 = tpu.dynamic_rotate %2 by %c7_i32_20 dim 1 : vector<8x128xf32>, i32 -> vector<8x128xf32>
    %c2_21 = arith.constant 2 : index
    %c0_22 = arith.constant 0 : index
    %45 = vector.load %arg4[%c2_21, %c0_22] : memref<9x128xf32, #tpu.memory_space<vmem>>, vector<1x128xf32>
    %46 = vector.broadcast %45 : vector<1x128xf32> to vector<8x128xf32>
    %47 = arith.mulf %44, %46 : vector<8x128xf32>
    %c1_i32_23 = arith.constant 1 : i32
    %48 = tpu.dynamic_rotate %2 by %c1_i32_23 dim 1 : vector<8x128xf32>, i32 -> vector<8x128xf32>
    %c3_24 = arith.constant 3 : index
    %c0_25 = arith.constant 0 : index
    %49 = vector.load %arg4[%c3_24, %c0_25] : memref<9x128xf32, #tpu.memory_space<vmem>>, vector<1x128xf32>
    %50 = vector.broadcast %49 : vector<1x128xf32> to vector<8x128xf32>
    %51 = arith.mulf %48, %50 : vector<8x128xf32>
    %c127_i32_26 = arith.constant 127 : i32
    %52 = tpu.dynamic_rotate %2 by %c127_i32_26 dim 1 : vector<8x128xf32>, i32 -> vector<8x128xf32>
    %c5_27 = arith.constant 5 : index
    %c0_28 = arith.constant 0 : index
    %53 = vector.load %arg4[%c5_27, %c0_28] : memref<9x128xf32, #tpu.memory_space<vmem>>, vector<1x128xf32>
    %54 = vector.broadcast %53 : vector<1x128xf32> to vector<8x128xf32>
    %55 = arith.mulf %52, %54 : vector<8x128xf32>
    %c121_i32_29 = arith.constant 121 : i32
    %56 = tpu.dynamic_rotate %2 by %c121_i32_29 dim 1 : vector<8x128xf32>, i32 -> vector<8x128xf32>
    %c6_30 = arith.constant 6 : index
    %c0_31 = arith.constant 0 : index
    %57 = vector.load %arg4[%c6_30, %c0_31] : memref<9x128xf32, #tpu.memory_space<vmem>>, vector<1x128xf32>
    %58 = vector.broadcast %57 : vector<1x128xf32> to vector<8x128xf32>
    %59 = arith.mulf %56, %58 : vector<8x128xf32>
    %c120_i32_32 = arith.constant 120 : i32
    %60 = tpu.dynamic_rotate %2 by %c120_i32_32 dim 1 : vector<8x128xf32>, i32 -> vector<8x128xf32>
    %c7_33 = arith.constant 7 : index
    %c0_34 = arith.constant 0 : index
    %61 = vector.load %arg4[%c7_33, %c0_34] : memref<9x128xf32, #tpu.memory_space<vmem>>, vector<1x128xf32>
    %62 = vector.broadcast %61 : vector<1x128xf32> to vector<8x128xf32>
    %63 = arith.mulf %60, %62 : vector<8x128xf32>
    %c119_i32_35 = arith.constant 119 : i32
    %64 = tpu.dynamic_rotate %2 by %c119_i32_35 dim 1 : vector<8x128xf32>, i32 -> vector<8x128xf32>
    %c8_36 = arith.constant 8 : index
    %c0_37 = arith.constant 0 : index
    %65 = vector.load %arg4[%c8_36, %c0_37] : memref<9x128xf32, #tpu.memory_space<vmem>>, vector<1x128xf32>
    %66 = vector.broadcast %65 : vector<1x128xf32> to vector<8x128xf32>
    %67 = arith.mulf %64, %66 : vector<8x128xf32>
    %68 = tpu.concatenate %7, %11, %15, %19, %1, %23, %27, %31, %35, %39, %43, %47, %51, %2, %55, %59 in 0 : vector<8x128xf32>, vector<8x128xf32>, vector<8x128xf32>, vector<8x128xf32>, vector<8x128xf32>, vector<8x128xf32>, vector<8x128xf32>, vector<8x128xf32>, vector<8x128xf32>, vector<8x128xf32>, vector<8x128xf32>, vector<8x128xf32>, vector<8x128xf32>, vector<8x128xf32>, vector<8x128xf32>, vector<8x128xf32> -> vector<128x128xf32>
    %69 = tpu.concatenate %63, %67 in 0 : vector<8x128xf32>, vector<8x128xf32> -> vector<16x128xf32>
    %70 = tpu.concatenate %68, %69 in 0 : vector<128x128xf32>, vector<16x128xf32> -> vector<144x128xf32>
    %71 = arith.truncf %70 : vector<144x128xf32> to vector<144x128xbf16>
    %c0_38 = arith.constant 0 : index
    %c0_39 = arith.constant 0 : index
    %72 = vector.load %arg5[%c0_38, %c0_39] : memref<16x144xbf16, #tpu.memory_space<vmem>>, vector<16x144xbf16>
    %cst_40 = arith.constant dense<0.000000e+00> : vector<16x128xf32>
    %73 = tpu.matmul %72, %71, %cst_40 {dimension_numbers = #tpu.dot_dimension_numbers<[1], [0], [0], [1], [0, 0, 1, 1], [], []>} : vector<16x144xbf16>, vector<144x128xbf16>, vector<16x128xf32> -> vector<16x128xf32>
    %c0_41 = arith.constant 0 : index
    %c0_42 = arith.constant 0 : index
    %74 = vector.load %arg6[%c0_41, %c0_42] : memref<16x128xf32, #tpu.memory_space<vmem>>, vector<16x128xf32>
    %75 = arith.addf %73, %74 : vector<16x128xf32>
    %cst_43 = arith.constant dense<0xFF800000> : vector<128xf32>
    %76 = vector.multi_reduction <maximumf>, %75, %cst_43 [0] : vector<16x128xf32> to vector<128xf32>
    %77 = vector.shape_cast %76 : vector<128xf32> to vector<1x128xf32>
    %78 = vector.broadcast %77 : vector<1x128xf32> to vector<16x128xf32>
    %79 = arith.subf %75, %78 : vector<16x128xf32>
    %80 = math.exp %79 : vector<16x128xf32>
    %cst_44 = arith.constant dense<0.000000e+00> : vector<128xf32>
    %81 = vector.multi_reduction <add>, %80, %cst_44 [0] : vector<16x128xf32> to vector<128xf32>
    %82 = vector.shape_cast %81 : vector<128xf32> to vector<1x128xf32>
    %83 = tpu.reciprocal %82 : vector<1x128xf32> -> vector<1x128xf32>
    %84 = vector.broadcast %83 : vector<1x128xf32> to vector<16x128xf32>
    %85 = arith.mulf %80, %84 : vector<16x128xf32>
    %c0_45 = arith.constant 0 : index
    %c0_46 = arith.constant 0 : index
    %86 = vector.load %arg22[%c0_45, %c0_46] : memref<16x128xf32, #tpu.memory_space<vmem>>, vector<16x128xf32>
    tpu.vector_store %arg22[%c0_45, %c0_46], %85 {strides = array<i32>} : memref<16x128xf32, #tpu.memory_space<vmem>>, vector<16x128xf32>,
    %87 = arith.truncf %85 : vector<16x128xf32> to vector<16x128xbf16>
    %c0_47 = arith.constant 0 : index
    %c0_48 = arith.constant 0 : index
    %88 = vector.load %arg3[%c0_47, %c0_48] : memref<128x128xbf16, #tpu.memory_space<vmem>>, vector<128x128xbf16>
    %cst_49 = arith.constant dense<0.000000e+00> : vector<16x128xf32>
    %89 = tpu.matmul %87, %88, %cst_49 {dimension_numbers = #tpu.dot_dimension_numbers<[1], [0], [0], [1], [0, 0, 1, 1], [], []>} : vector<16x128xbf16>, vector<128x128xbf16>, vector<16x128xf32> -> vector<16x128xf32>
    %c9_i32_50 = arith.constant 9 : i32
    %90 = tpu.dynamic_rotate %89 by %c9_i32_50 dim 1 : vector<16x128xf32>, i32 -> vector<16x128xf32>
    %c0_51 = arith.constant 0 : index
    %c0_52 = arith.constant 0 : index
    %91 = vector.load %arg4[%c0_51, %c0_52] : memref<9x128xf32, #tpu.memory_space<vmem>>, vector<1x128xf32>
    %92 = vector.broadcast %91 : vector<1x128xf32> to vector<16x128xf32>
    %93 = arith.mulf %90, %92 : vector<16x128xf32>
    %c8_i32_53 = arith.constant 8 : i32
    %94 = tpu.dynamic_rotate %89 by %c8_i32_53 dim 1 : vector<16x128xf32>, i32 -> vector<16x128xf32>
    %c1_54 = arith.constant 1 : index
    %c0_55 = arith.constant 0 : index
    %95 = vector.load %arg4[%c1_54, %c0_55] : memref<9x128xf32, #tpu.memory_space<vmem>>, vector<1x128xf32>
    %96 = vector.broadcast %95 : vector<1x128xf32> to vector<16x128xf32>
    %97 = arith.mulf %94, %96 : vector<16x128xf32>
    %c7_i32_56 = arith.constant 7 : i32
    %98 = tpu.dynamic_rotate %89 by %c7_i32_56 dim 1 : vector<16x128xf32>, i32 -> vector<16x128xf32>
    %c2_57 = arith.constant 2 : index
    %c0_58 = arith.constant 0 : index
    %99 = vector.load %arg4[%c2_57, %c0_58] : memref<9x128xf32, #tpu.memory_space<vmem>>, vector<1x128xf32>
    %100 = vector.broadcast %99 : vector<1x128xf32> to vector<16x128xf32>
    %101 = arith.mulf %98, %100 : vector<16x128xf32>
    %c1_i32_59 = arith.constant 1 : i32
    %102 = tpu.dynamic_rotate %89 by %c1_i32_59 dim 1 : vector<16x128xf32>, i32 -> vector<16x128xf32>
    %c3_60 = arith.constant 3 : index
    %c0_61 = arith.constant 0 : index
    %103 = vector.load %arg4[%c3_60, %c0_61] : memref<9x128xf32, #tpu.memory_space<vmem>>, vector<1x128xf32>
    %104 = vector.broadcast %103 : vector<1x128xf32> to vector<16x128xf32>
    %105 = arith.mulf %102, %104 : vector<16x128xf32>
    %c127_i32_62 = arith.constant 127 : i32
    %106 = tpu.dynamic_rotate %89 by %c127_i32_62 dim 1 : vector<16x128xf32>, i32 -> vector<16x128xf32>
    %c5_63 = arith.constant 5 : index
    %c0_64 = arith.constant 0 : index
    %107 = vector.load %arg4[%c5_63, %c0_64] : memref<9x128xf32, #tpu.memory_space<vmem>>, vector<1x128xf32>
    %108 = vector.broadcast %107 : vector<1x128xf32> to vector<16x128xf32>
    %109 = arith.mulf %106, %108 : vector<16x128xf32>
    %c121_i32_65 = arith.constant 121 : i32
    %110 = tpu.dynamic_rotate %89 by %c121_i32_65 dim 1 : vector<16x128xf32>, i32 -> vector<16x128xf32>
    %c6_66 = arith.constant 6 : index
    %c0_67 = arith.constant 0 : index
    %111 = vector.load %arg4[%c6_66, %c0_67] : memref<9x128xf32, #tpu.memory_space<vmem>>, vector<1x128xf32>
    %112 = vector.broadcast %111 : vector<1x128xf32> to vector<16x128xf32>
    %113 = arith.mulf %110, %112 : vector<16x128xf32>
    %c120_i32_68 = arith.constant 120 : i32
    %114 = tpu.dynamic_rotate %89 by %c120_i32_68 dim 1 : vector<16x128xf32>, i32 -> vector<16x128xf32>
    %c7_69 = arith.constant 7 : index
    %c0_70 = arith.constant 0 : index
    %115 = vector.load %arg4[%c7_69, %c0_70] : memref<9x128xf32, #tpu.memory_space<vmem>>, vector<1x128xf32>
    %116 = vector.broadcast %115 : vector<1x128xf32> to vector<16x128xf32>
    %117 = arith.mulf %114, %116 : vector<16x128xf32>
    %c119_i32_71 = arith.constant 119 : i32
    %118 = tpu.dynamic_rotate %89 by %c119_i32_71 dim 1 : vector<16x128xf32>, i32 -> vector<16x128xf32>
    %c8_72 = arith.constant 8 : index
    %c0_73 = arith.constant 0 : index
    %119 = vector.load %arg4[%c8_72, %c0_73] : memref<9x128xf32, #tpu.memory_space<vmem>>, vector<1x128xf32>
    %120 = vector.broadcast %119 : vector<1x128xf32> to vector<16x128xf32>
    %121 = arith.mulf %118, %120 : vector<16x128xf32>
    %122 = tpu.concatenate %7, %11, %15, %19, %1, %23, %27, %31, %35, %93, %97, %101, %105, %89, %109, %113 in 0 : vector<8x128xf32>, vector<8x128xf32>, vector<8x128xf32>, vector<8x128xf32>, vector<8x128xf32>, vector<8x128xf32>, vector<8x128xf32>, vector<8x128xf32>, vector<8x128xf32>, vector<16x128xf32>, vector<16x128xf32>, vector<16x128xf32>, vector<16x128xf32>, vector<16x128xf32>, vector<16x128xf32>, vector<16x128xf32> -> vector<184x128xf32>
    %123 = tpu.concatenate %117, %121, %0 in 0 : vector<16x128xf32>, vector<16x128xf32>, vector<8x128xf32> -> vector<40x128xf32>
    %124 = tpu.concatenate %122, %123 in 0 : vector<184x128xf32>, vector<40x128xf32> -> vector<224x128xf32>
    %125 = arith.truncf %124 : vector<224x128xf32> to vector<224x128xbf16>
    %c0_74 = arith.constant 0 : index
    %c0_75 = arith.constant 0 : index
    %126 = vector.load %arg7[%c0_74, %c0_75] : memref<16x224xbf16, #tpu.memory_space<vmem>>, vector<16x224xbf16>
    %cst_76 = arith.constant dense<0.000000e+00> : vector<16x128xf32>
    %127 = tpu.matmul %126, %125, %cst_76 {dimension_numbers = #tpu.dot_dimension_numbers<[1], [0], [0], [1], [0, 0, 1, 1], [], []>} : vector<16x224xbf16>, vector<224x128xbf16>, vector<16x128xf32> -> vector<16x128xf32>
    %c0_77 = arith.constant 0 : index
    %c0_78 = arith.constant 0 : index
    %128 = vector.load %arg8[%c0_77, %c0_78] : memref<16x128xf32, #tpu.memory_space<vmem>>, vector<16x128xf32>
    %129 = arith.addf %127, %128 : vector<16x128xf32>
    %cst_79 = arith.constant 0.000000e+00 : f32
    %130 = vector.broadcast %cst_79 : f32 to vector<16x128xf32>
    %131 = arith.maximumf %129, %130 : vector<16x128xf32>
    %c9_i32_80 = arith.constant 9 : i32
    %132 = tpu.dynamic_rotate %131 by %c9_i32_80 dim 1 : vector<16x128xf32>, i32 -> vector<16x128xf32>
    %c0_81 = arith.constant 0 : index
    %c0_82 = arith.constant 0 : index
    %133 = vector.load %arg4[%c0_81, %c0_82] : memref<9x128xf32, #tpu.memory_space<vmem>>, vector<1x128xf32>
    %134 = vector.broadcast %133 : vector<1x128xf32> to vector<16x128xf32>
    %135 = arith.mulf %132, %134 : vector<16x128xf32>
    %c8_i32_83 = arith.constant 8 : i32
    %136 = tpu.dynamic_rotate %131 by %c8_i32_83 dim 1 : vector<16x128xf32>, i32 -> vector<16x128xf32>
    %c1_84 = arith.constant 1 : index
    %c0_85 = arith.constant 0 : index
    %137 = vector.load %arg4[%c1_84, %c0_85] : memref<9x128xf32, #tpu.memory_space<vmem>>, vector<1x128xf32>
    %138 = vector.broadcast %137 : vector<1x128xf32> to vector<16x128xf32>
    %139 = arith.mulf %136, %138 : vector<16x128xf32>
    %c7_i32_86 = arith.constant 7 : i32
    %140 = tpu.dynamic_rotate %131 by %c7_i32_86 dim 1 : vector<16x128xf32>, i32 -> vector<16x128xf32>
    %c2_87 = arith.constant 2 : index
    %c0_88 = arith.constant 0 : index
    %141 = vector.load %arg4[%c2_87, %c0_88] : memref<9x128xf32, #tpu.memory_space<vmem>>, vector<1x128xf32>
    %142 = vector.broadcast %141 : vector<1x128xf32> to vector<16x128xf32>
    %143 = arith.mulf %140, %142 : vector<16x128xf32>
    %c1_i32_89 = arith.constant 1 : i32
    %144 = tpu.dynamic_rotate %131 by %c1_i32_89 dim 1 : vector<16x128xf32>, i32 -> vector<16x128xf32>
    %c3_90 = arith.constant 3 : index
    %c0_91 = arith.constant 0 : index
    %145 = vector.load %arg4[%c3_90, %c0_91] : memref<9x128xf32, #tpu.memory_space<vmem>>, vector<1x128xf32>
    %146 = vector.broadcast %145 : vector<1x128xf32> to vector<16x128xf32>
    %147 = arith.mulf %144, %146 : vector<16x128xf32>
    %c127_i32_92 = arith.constant 127 : i32
    %148 = tpu.dynamic_rotate %131 by %c127_i32_92 dim 1 : vector<16x128xf32>, i32 -> vector<16x128xf32>
    %c5_93 = arith.constant 5 : index
    %c0_94 = arith.constant 0 : index
    %149 = vector.load %arg4[%c5_93, %c0_94] : memref<9x128xf32, #tpu.memory_space<vmem>>, vector<1x128xf32>
    %150 = vector.broadcast %149 : vector<1x128xf32> to vector<16x128xf32>
    %151 = arith.mulf %148, %150 : vector<16x128xf32>
    %c121_i32_95 = arith.constant 121 : i32
    %152 = tpu.dynamic_rotate %131 by %c121_i32_95 dim 1 : vector<16x128xf32>, i32 -> vector<16x128xf32>
    %c6_96 = arith.constant 6 : index
    %c0_97 = arith.constant 0 : index
    %153 = vector.load %arg4[%c6_96, %c0_97] : memref<9x128xf32, #tpu.memory_space<vmem>>, vector<1x128xf32>
    %154 = vector.broadcast %153 : vector<1x128xf32> to vector<16x128xf32>
    %155 = arith.mulf %152, %154 : vector<16x128xf32>
    %c120_i32_98 = arith.constant 120 : i32
    %156 = tpu.dynamic_rotate %131 by %c120_i32_98 dim 1 : vector<16x128xf32>, i32 -> vector<16x128xf32>
    %c7_99 = arith.constant 7 : index
    %c0_100 = arith.constant 0 : index
    %157 = vector.load %arg4[%c7_99, %c0_100] : memref<9x128xf32, #tpu.memory_space<vmem>>, vector<1x128xf32>
    %158 = vector.broadcast %157 : vector<1x128xf32> to vector<16x128xf32>
    %159 = arith.mulf %156, %158 : vector<16x128xf32>
    %c119_i32_101 = arith.constant 119 : i32
    %160 = tpu.dynamic_rotate %131 by %c119_i32_101 dim 1 : vector<16x128xf32>, i32 -> vector<16x128xf32>
    %c8_102 = arith.constant 8 : index
    %c0_103 = arith.constant 0 : index
    %161 = vector.load %arg4[%c8_102, %c0_103] : memref<9x128xf32, #tpu.memory_space<vmem>>, vector<1x128xf32>
    %162 = vector.broadcast %161 : vector<1x128xf32> to vector<16x128xf32>
    %163 = arith.mulf %160, %162 : vector<16x128xf32>
    %164 = tpu.concatenate %135, %139, %143, %147, %131, %151, %155, %159, %163, %39, %43, %47, %51, %2, %55, %59 in 0 : vector<16x128xf32>, vector<16x128xf32>, vector<16x128xf32>, vector<16x128xf32>, vector<16x128xf32>, vector<16x128xf32>, vector<16x128xf32>, vector<16x128xf32>, vector<16x128xf32>, vector<8x128xf32>, vector<8x128xf32>, vector<8x128xf32>, vector<8x128xf32>, vector<8x128xf32>, vector<8x128xf32>, vector<8x128xf32> -> vector<200x128xf32>
    %165 = tpu.concatenate %63, %67, %0 in 0 : vector<8x128xf32>, vector<8x128xf32>, vector<8x128xf32> -> vector<24x128xf32>
    %166 = tpu.concatenate %164, %165 in 0 : vector<200x128xf32>, vector<24x128xf32> -> vector<224x128xf32>
    %167 = arith.truncf %166 : vector<224x128xf32> to vector<224x128xbf16>
    %c0_104 = arith.constant 0 : index
    %c0_105 = arith.constant 0 : index
    %168 = vector.load %arg9[%c0_104, %c0_105] : memref<16x224xbf16, #tpu.memory_space<vmem>>, vector<16x224xbf16>
    %cst_106 = arith.constant dense<0.000000e+00> : vector<16x128xf32>
    %169 = tpu.matmul %168, %167, %cst_106 {dimension_numbers = #tpu.dot_dimension_numbers<[1], [0], [0], [1], [0, 0, 1, 1], [], []>} : vector<16x224xbf16>, vector<224x128xbf16>, vector<16x128xf32> -> vector<16x128xf32>
    %c0_107 = arith.constant 0 : index
    %c0_108 = arith.constant 0 : index
    %170 = vector.load %arg10[%c0_107, %c0_108] : memref<16x128xf32, #tpu.memory_space<vmem>>, vector<16x128xf32>
    %171 = arith.addf %169, %170 : vector<16x128xf32>
    %172 = vector.extract_strided_slice %171 {offsets = [0, 0], sizes = [8, 128], strides = [1, 1]} : vector<16x128xf32> to vector<8x128xf32>
    %173 = arith.negf %172 : vector<8x128xf32>
    %174 = math.exp %173 : vector<8x128xf32>
    %cst_109 = arith.constant 1.000000e+00 : f32
    %175 = vector.broadcast %cst_109 : f32 to vector<8x128xf32>
    %176 = arith.addf %175, %174 : vector<8x128xf32>
    %177 = arith.divf %175, %176 : vector<8x128xf32>
    %178 = vector.extract_strided_slice %171 {offsets = [8, 0], sizes = [8, 128], strides = [1, 1]} : vector<16x128xf32> to vector<8x128xf32>
    %179 = arith.negf %178 : vector<8x128xf32>
    %180 = math.exp %179 : vector<8x128xf32>
    %cst_110 = arith.constant 1.000000e+00 : f32
    %181 = vector.broadcast %cst_110 : f32 to vector<8x128xf32>
    %182 = arith.addf %181, %180 : vector<8x128xf32>
    %183 = arith.divf %181, %182 : vector<8x128xf32>
    %184 = arith.mulf %183, %2 : vector<8x128xf32>
    %c9_i32_111 = arith.constant 9 : i32
    %185 = tpu.dynamic_rotate %184 by %c9_i32_111 dim 1 : vector<8x128xf32>, i32 -> vector<8x128xf32>
    %c0_112 = arith.constant 0 : index
    %c0_113 = arith.constant 0 : index
    %186 = vector.load %arg4[%c0_112, %c0_113] : memref<9x128xf32, #tpu.memory_space<vmem>>, vector<1x128xf32>
    %187 = vector.broadcast %186 : vector<1x128xf32> to vector<8x128xf32>
    %188 = arith.mulf %185, %187 : vector<8x128xf32>
    %c8_i32_114 = arith.constant 8 : i32
    %189 = tpu.dynamic_rotate %184 by %c8_i32_114 dim 1 : vector<8x128xf32>, i32 -> vector<8x128xf32>
    %c1_115 = arith.constant 1 : index
    %c0_116 = arith.constant 0 : index
    %190 = vector.load %arg4[%c1_115, %c0_116] : memref<9x128xf32, #tpu.memory_space<vmem>>, vector<1x128xf32>
    %191 = vector.broadcast %190 : vector<1x128xf32> to vector<8x128xf32>
    %192 = arith.mulf %189, %191 : vector<8x128xf32>
    %c7_i32_117 = arith.constant 7 : i32
    %193 = tpu.dynamic_rotate %184 by %c7_i32_117 dim 1 : vector<8x128xf32>, i32 -> vector<8x128xf32>
    %c2_118 = arith.constant 2 : index
    %c0_119 = arith.constant 0 : index
    %194 = vector.load %arg4[%c2_118, %c0_119] : memref<9x128xf32, #tpu.memory_space<vmem>>, vector<1x128xf32>
    %195 = vector.broadcast %194 : vector<1x128xf32> to vector<8x128xf32>
    %196 = arith.mulf %193, %195 : vector<8x128xf32>
    %c1_i32_120 = arith.constant 1 : i32
    %197 = tpu.dynamic_rotate %184 by %c1_i32_120 dim 1 : vector<8x128xf32>, i32 -> vector<8x128xf32>
    %c3_121 = arith.constant 3 : index
    %c0_122 = arith.constant 0 : index
    %198 = vector.load %arg4[%c3_121, %c0_122] : memref<9x128xf32, #tpu.memory_space<vmem>>, vector<1x128xf32>
    %199 = vector.broadcast %198 : vector<1x128xf32> to vector<8x128xf32>
    %200 = arith.mulf %197, %199 : vector<8x128xf32>
    %c127_i32_123 = arith.constant 127 : i32
    %201 = tpu.dynamic_rotate %184 by %c127_i32_123 dim 1 : vector<8x128xf32>, i32 -> vector<8x128xf32>
    %c5_124 = arith.constant 5 : index
    %c0_125 = arith.constant 0 : index
    %202 = vector.load %arg4[%c5_124, %c0_125] : memref<9x128xf32, #tpu.memory_space<vmem>>, vector<1x128xf32>
    %203 = vector.broadcast %202 : vector<1x128xf32> to vector<8x128xf32>
    %204 = arith.mulf %201, %203 : vector<8x128xf32>
    %c121_i32_126 = arith.constant 121 : i32
    %205 = tpu.dynamic_rotate %184 by %c121_i32_126 dim 1 : vector<8x128xf32>, i32 -> vector<8x128xf32>
    %c6_127 = arith.constant 6 : index
    %c0_128 = arith.constant 0 : index
    %206 = vector.load %arg4[%c6_127, %c0_128] : memref<9x128xf32, #tpu.memory_space<vmem>>, vector<1x128xf32>
    %207 = vector.broadcast %206 : vector<1x128xf32> to vector<8x128xf32>
    %208 = arith.mulf %205, %207 : vector<8x128xf32>
    %c120_i32_129 = arith.constant 120 : i32
    %209 = tpu.dynamic_rotate %184 by %c120_i32_129 dim 1 : vector<8x128xf32>, i32 -> vector<8x128xf32>
    %c7_130 = arith.constant 7 : index
    %c0_131 = arith.constant 0 : index
    %210 = vector.load %arg4[%c7_130, %c0_131] : memref<9x128xf32, #tpu.memory_space<vmem>>, vector<1x128xf32>
    %211 = vector.broadcast %210 : vector<1x128xf32> to vector<8x128xf32>
    %212 = arith.mulf %209, %211 : vector<8x128xf32>
    %c119_i32_132 = arith.constant 119 : i32
    %213 = tpu.dynamic_rotate %184 by %c119_i32_132 dim 1 : vector<8x128xf32>, i32 -> vector<8x128xf32>
    %c8_133 = arith.constant 8 : index
    %c0_134 = arith.constant 0 : index
    %214 = vector.load %arg4[%c8_133, %c0_134] : memref<9x128xf32, #tpu.memory_space<vmem>>, vector<1x128xf32>
    %215 = vector.broadcast %214 : vector<1x128xf32> to vector<8x128xf32>
    %216 = arith.mulf %213, %215 : vector<8x128xf32>
    %217 = tpu.concatenate %135, %139, %143, %147, %131, %151, %155, %159, %163, %188, %192, %196, %200, %184, %204, %208 in 0 : vector<16x128xf32>, vector<16x128xf32>, vector<16x128xf32>, vector<16x128xf32>, vector<16x128xf32>, vector<16x128xf32>, vector<16x128xf32>, vector<16x128xf32>, vector<16x128xf32>, vector<8x128xf32>, vector<8x128xf32>, vector<8x128xf32>, vector<8x128xf32>, vector<8x128xf32>, vector<8x128xf32>, vector<8x128xf32> -> vector<200x128xf32>
    %218 = tpu.concatenate %212, %216, %0 in 0 : vector<8x128xf32>, vector<8x128xf32>, vector<8x128xf32> -> vector<24x128xf32>
    %219 = tpu.concatenate %217, %218 in 0 : vector<200x128xf32>, vector<24x128xf32> -> vector<224x128xf32>
    %220 = arith.truncf %219 : vector<224x128xf32> to vector<224x128xbf16>
    %c0_135 = arith.constant 0 : index
    %c0_136 = arith.constant 0 : index
    %221 = vector.load %arg11[%c0_135, %c0_136] : memref<16x224xbf16, #tpu.memory_space<vmem>>, vector<16x224xbf16>
    %cst_137 = arith.constant dense<0.000000e+00> : vector<16x128xf32>
    %222 = tpu.matmul %221, %220, %cst_137 {dimension_numbers = #tpu.dot_dimension_numbers<[1], [0], [0], [1], [0, 0, 1, 1], [], []>} : vector<16x224xbf16>, vector<224x128xbf16>, vector<16x128xf32> -> vector<16x128xf32>
    %223 = vector.extract_strided_slice %222 {offsets = [0, 0], sizes = [8, 128], strides = [1, 1]} : vector<16x128xf32> to vector<8x128xf32>
    %c0_138 = arith.constant 0 : index
    %c0_139 = arith.constant 0 : index
    %224 = vector.load %arg12[%c0_138, %c0_139] : memref<8x128xf32, #tpu.memory_space<vmem>>, vector<8x128xf32>
    %225 = arith.addf %223, %224 : vector<8x128xf32>
    %cst_140 = arith.constant 1.000000e+00 : f32
    %226 = vector.broadcast %cst_140 : f32 to vector<8x128xf32>
    %227 = arith.subf %226, %177 : vector<8x128xf32>
    %228 = arith.mulf %227, %2 : vector<8x128xf32>
    %229 = math.tanh %225 : vector<8x128xf32>
    %230 = arith.mulf %177, %229 : vector<8x128xf32>
    %231 = arith.addf %228, %230 : vector<8x128xf32>
    %c0_141 = arith.constant 0 : index
    %c0_142 = arith.constant 0 : index
    %232 = vector.load %arg20[%c0_141, %c0_142] : memref<8x128xf32, #tpu.memory_space<vmem>>, vector<8x128xf32>
    tpu.vector_store %arg20[%c0_141, %c0_142], %231 {strides = array<i32>} : memref<8x128xf32, #tpu.memory_space<vmem>>, vector<8x128xf32>,
    %c9_i32_143 = arith.constant 9 : i32
    %233 = tpu.dynamic_rotate %231 by %c9_i32_143 dim 1 : vector<8x128xf32>, i32 -> vector<8x128xf32>
    %c0_144 = arith.constant 0 : index
    %c0_145 = arith.constant 0 : index
    %234 = vector.load %arg4[%c0_144, %c0_145] : memref<9x128xf32, #tpu.memory_space<vmem>>, vector<1x128xf32>
    %235 = vector.broadcast %234 : vector<1x128xf32> to vector<8x128xf32>
    %236 = arith.mulf %233, %235 : vector<8x128xf32>
    %c8_i32_146 = arith.constant 8 : i32
    %237 = tpu.dynamic_rotate %231 by %c8_i32_146 dim 1 : vector<8x128xf32>, i32 -> vector<8x128xf32>
    %c1_147 = arith.constant 1 : index
    %c0_148 = arith.constant 0 : index
    %238 = vector.load %arg4[%c1_147, %c0_148] : memref<9x128xf32, #tpu.memory_space<vmem>>, vector<1x128xf32>
    %239 = vector.broadcast %238 : vector<1x128xf32> to vector<8x128xf32>
    %240 = arith.mulf %237, %239 : vector<8x128xf32>
    %c7_i32_149 = arith.constant 7 : i32
    %241 = tpu.dynamic_rotate %231 by %c7_i32_149 dim 1 : vector<8x128xf32>, i32 -> vector<8x128xf32>
    %c2_150 = arith.constant 2 : index
    %c0_151 = arith.constant 0 : index
    %242 = vector.load %arg4[%c2_150, %c0_151] : memref<9x128xf32, #tpu.memory_space<vmem>>, vector<1x128xf32>
    %243 = vector.broadcast %242 : vector<1x128xf32> to vector<8x128xf32>
    %244 = arith.mulf %241, %243 : vector<8x128xf32>
    %c1_i32_152 = arith.constant 1 : i32
    %245 = tpu.dynamic_rotate %231 by %c1_i32_152 dim 1 : vector<8x128xf32>, i32 -> vector<8x128xf32>
    %c3_153 = arith.constant 3 : index
    %c0_154 = arith.constant 0 : index
    %246 = vector.load %arg4[%c3_153, %c0_154] : memref<9x128xf32, #tpu.memory_space<vmem>>, vector<1x128xf32>
    %247 = vector.broadcast %246 : vector<1x128xf32> to vector<8x128xf32>
    %248 = arith.mulf %245, %247 : vector<8x128xf32>
    %c127_i32_155 = arith.constant 127 : i32
    %249 = tpu.dynamic_rotate %231 by %c127_i32_155 dim 1 : vector<8x128xf32>, i32 -> vector<8x128xf32>
    %c5_156 = arith.constant 5 : index
    %c0_157 = arith.constant 0 : index
    %250 = vector.load %arg4[%c5_156, %c0_157] : memref<9x128xf32, #tpu.memory_space<vmem>>, vector<1x128xf32>
    %251 = vector.broadcast %250 : vector<1x128xf32> to vector<8x128xf32>
    %252 = arith.mulf %249, %251 : vector<8x128xf32>
    %c121_i32_158 = arith.constant 121 : i32
    %253 = tpu.dynamic_rotate %231 by %c121_i32_158 dim 1 : vector<8x128xf32>, i32 -> vector<8x128xf32>
    %c6_159 = arith.constant 6 : index
    %c0_160 = arith.constant 0 : index
    %254 = vector.load %arg4[%c6_159, %c0_160] : memref<9x128xf32, #tpu.memory_space<vmem>>, vector<1x128xf32>
    %255 = vector.broadcast %254 : vector<1x128xf32> to vector<8x128xf32>
    %256 = arith.mulf %253, %255 : vector<8x128xf32>
    %c120_i32_161 = arith.constant 120 : i32
    %257 = tpu.dynamic_rotate %231 by %c120_i32_161 dim 1 : vector<8x128xf32>, i32 -> vector<8x128xf32>
    %c7_162 = arith.constant 7 : index
    %c0_163 = arith.constant 0 : index
    %258 = vector.load %arg4[%c7_162, %c0_163] : memref<9x128xf32, #tpu.memory_space<vmem>>, vector<1x128xf32>
    %259 = vector.broadcast %258 : vector<1x128xf32> to vector<8x128xf32>
    %260 = arith.mulf %257, %259 : vector<8x128xf32>
    %c119_i32_164 = arith.constant 119 : i32
    %261 = tpu.dynamic_rotate %231 by %c119_i32_164 dim 1 : vector<8x128xf32>, i32 -> vector<8x128xf32>
    %c8_165 = arith.constant 8 : index
    %c0_166 = arith.constant 0 : index
    %262 = vector.load %arg4[%c8_165, %c0_166] : memref<9x128xf32, #tpu.memory_space<vmem>>, vector<1x128xf32>
    %263 = vector.broadcast %262 : vector<1x128xf32> to vector<8x128xf32>
    %264 = arith.mulf %261, %263 : vector<8x128xf32>
    %c9_i32_167 = arith.constant 9 : i32
    %265 = tpu.dynamic_rotate %3 by %c9_i32_167 dim 1 : vector<8x128xf32>, i32 -> vector<8x128xf32>
    %c0_168 = arith.constant 0 : index
    %c0_169 = arith.constant 0 : index
    %266 = vector.load %arg4[%c0_168, %c0_169] : memref<9x128xf32, #tpu.memory_space<vmem>>, vector<1x128xf32>
    %267 = vector.broadcast %266 : vector<1x128xf32> to vector<8x128xf32>
    %268 = arith.mulf %265, %267 : vector<8x128xf32>
    %c8_i32_170 = arith.constant 8 : i32
    %269 = tpu.dynamic_rotate %3 by %c8_i32_170 dim 1 : vector<8x128xf32>, i32 -> vector<8x128xf32>
    %c1_171 = arith.constant 1 : index
    %c0_172 = arith.constant 0 : index
    %270 = vector.load %arg4[%c1_171, %c0_172] : memref<9x128xf32, #tpu.memory_space<vmem>>, vector<1x128xf32>
    %271 = vector.broadcast %270 : vector<1x128xf32> to vector<8x128xf32>
    %272 = arith.mulf %269, %271 : vector<8x128xf32>
    %c7_i32_173 = arith.constant 7 : i32
    %273 = tpu.dynamic_rotate %3 by %c7_i32_173 dim 1 : vector<8x128xf32>, i32 -> vector<8x128xf32>
    %c2_174 = arith.constant 2 : index
    %c0_175 = arith.constant 0 : index
    %274 = vector.load %arg4[%c2_174, %c0_175] : memref<9x128xf32, #tpu.memory_space<vmem>>, vector<1x128xf32>
    %275 = vector.broadcast %274 : vector<1x128xf32> to vector<8x128xf32>
    %276 = arith.mulf %273, %275 : vector<8x128xf32>
    %c1_i32_176 = arith.constant 1 : i32
    %277 = tpu.dynamic_rotate %3 by %c1_i32_176 dim 1 : vector<8x128xf32>, i32 -> vector<8x128xf32>
    %c3_177 = arith.constant 3 : index
    %c0_178 = arith.constant 0 : index
    %278 = vector.load %arg4[%c3_177, %c0_178] : memref<9x128xf32, #tpu.memory_space<vmem>>, vector<1x128xf32>
    %279 = vector.broadcast %278 : vector<1x128xf32> to vector<8x128xf32>
    %280 = arith.mulf %277, %279 : vector<8x128xf32>
    %c127_i32_179 = arith.constant 127 : i32
    %281 = tpu.dynamic_rotate %3 by %c127_i32_179 dim 1 : vector<8x128xf32>, i32 -> vector<8x128xf32>
    %c5_180 = arith.constant 5 : index
    %c0_181 = arith.constant 0 : index
    %282 = vector.load %arg4[%c5_180, %c0_181] : memref<9x128xf32, #tpu.memory_space<vmem>>, vector<1x128xf32>
    %283 = vector.broadcast %282 : vector<1x128xf32> to vector<8x128xf32>
    %284 = arith.mulf %281, %283 : vector<8x128xf32>
    %c121_i32_182 = arith.constant 121 : i32
    %285 = tpu.dynamic_rotate %3 by %c121_i32_182 dim 1 : vector<8x128xf32>, i32 -> vector<8x128xf32>
    %c6_183 = arith.constant 6 : index
    %c0_184 = arith.constant 0 : index
    %286 = vector.load %arg4[%c6_183, %c0_184] : memref<9x128xf32, #tpu.memory_space<vmem>>, vector<1x128xf32>
    %287 = vector.broadcast %286 : vector<1x128xf32> to vector<8x128xf32>
    %288 = arith.mulf %285, %287 : vector<8x128xf32>
    %c120_i32_185 = arith.constant 120 : i32
    %289 = tpu.dynamic_rotate %3 by %c120_i32_185 dim 1 : vector<8x128xf32>, i32 -> vector<8x128xf32>
    %c7_186 = arith.constant 7 : index
    %c0_187 = arith.constant 0 : index
    %290 = vector.load %arg4[%c7_186, %c0_187] : memref<9x128xf32, #tpu.memory_space<vmem>>, vector<1x128xf32>
    %291 = vector.broadcast %290 : vector<1x128xf32> to vector<8x128xf32>
    %292 = arith.mulf %289, %291 : vector<8x128xf32>
    %c119_i32_188 = arith.constant 119 : i32
    %293 = tpu.dynamic_rotate %3 by %c119_i32_188 dim 1 : vector<8x128xf32>, i32 -> vector<8x128xf32>
    %c8_189 = arith.constant 8 : index
    %c0_190 = arith.constant 0 : index
    %294 = vector.load %arg4[%c8_189, %c0_190] : memref<9x128xf32, #tpu.memory_space<vmem>>, vector<1x128xf32>
    %295 = vector.broadcast %294 : vector<1x128xf32> to vector<8x128xf32>
    %296 = arith.mulf %293, %295 : vector<8x128xf32>
    %297 = tpu.concatenate %236, %240, %244, %248, %231, %252, %256, %260, %264, %268, %272, %276, %280, %3, %284, %288 in 0 : vector<8x128xf32>, vector<8x128xf32>, vector<8x128xf32>, vector<8x128xf32>, vector<8x128xf32>, vector<8x128xf32>, vector<8x128xf32>, vector<8x128xf32>, vector<8x128xf32>, vector<8x128xf32>, vector<8x128xf32>, vector<8x128xf32>, vector<8x128xf32>, vector<8x128xf32>, vector<8x128xf32>, vector<8x128xf32> -> vector<128x128xf32>
    %298 = tpu.concatenate %292, %296 in 0 : vector<8x128xf32>, vector<8x128xf32> -> vector<16x128xf32>
    %299 = tpu.concatenate %297, %298 in 0 : vector<128x128xf32>, vector<16x128xf32> -> vector<144x128xf32>
    %300 = arith.truncf %299 : vector<144x128xf32> to vector<144x128xbf16>
    %c0_191 = arith.constant 0 : index
    %c0_192 = arith.constant 0 : index
    %301 = vector.load %arg13[%c0_191, %c0_192] : memref<16x144xbf16, #tpu.memory_space<vmem>>, vector<16x144xbf16>
    %cst_193 = arith.constant dense<0.000000e+00> : vector<16x128xf32>
    %302 = tpu.matmul %301, %300, %cst_193 {dimension_numbers = #tpu.dot_dimension_numbers<[1], [0], [0], [1], [0, 0, 1, 1], [], []>} : vector<16x144xbf16>, vector<144x128xbf16>, vector<16x128xf32> -> vector<16x128xf32>
    %c0_194 = arith.constant 0 : index
    %c0_195 = arith.constant 0 : index
    %303 = vector.load %arg14[%c0_194, %c0_195] : memref<16x128xf32, #tpu.memory_space<vmem>>, vector<16x128xf32>
    %304 = arith.addf %302, %303 : vector<16x128xf32>
    %305 = vector.extract_strided_slice %304 {offsets = [0, 0], sizes = [8, 128], strides = [1, 1]} : vector<16x128xf32> to vector<8x128xf32>
    %306 = arith.negf %305 : vector<8x128xf32>
    %307 = math.exp %306 : vector<8x128xf32>
    %cst_196 = arith.constant 1.000000e+00 : f32
    %308 = vector.broadcast %cst_196 : f32 to vector<8x128xf32>
    %309 = arith.addf %308, %307 : vector<8x128xf32>
    %310 = arith.divf %308, %309 : vector<8x128xf32>
    %311 = vector.extract_strided_slice %304 {offsets = [8, 0], sizes = [8, 128], strides = [1, 1]} : vector<16x128xf32> to vector<8x128xf32>
    %312 = arith.negf %311 : vector<8x128xf32>
    %313 = math.exp %312 : vector<8x128xf32>
    %cst_197 = arith.constant 1.000000e+00 : f32
    %314 = vector.broadcast %cst_197 : f32 to vector<8x128xf32>
    %315 = arith.addf %314, %313 : vector<8x128xf32>
    %316 = arith.divf %314, %315 : vector<8x128xf32>
    %317 = arith.mulf %316, %3 : vector<8x128xf32>
    %c9_i32_198 = arith.constant 9 : i32
    %318 = tpu.dynamic_rotate %317 by %c9_i32_198 dim 1 : vector<8x128xf32>, i32 -> vector<8x128xf32>
    %c0_199 = arith.constant 0 : index
    %c0_200 = arith.constant 0 : index
    %319 = vector.load %arg4[%c0_199, %c0_200] : memref<9x128xf32, #tpu.memory_space<vmem>>, vector<1x128xf32>
    %320 = vector.broadcast %319 : vector<1x128xf32> to vector<8x128xf32>
    %321 = arith.mulf %318, %320 : vector<8x128xf32>
    %c8_i32_201 = arith.constant 8 : i32
    %322 = tpu.dynamic_rotate %317 by %c8_i32_201 dim 1 : vector<8x128xf32>, i32 -> vector<8x128xf32>
    %c1_202 = arith.constant 1 : index
    %c0_203 = arith.constant 0 : index
    %323 = vector.load %arg4[%c1_202, %c0_203] : memref<9x128xf32, #tpu.memory_space<vmem>>, vector<1x128xf32>
    %324 = vector.broadcast %323 : vector<1x128xf32> to vector<8x128xf32>
    %325 = arith.mulf %322, %324 : vector<8x128xf32>
    %c7_i32_204 = arith.constant 7 : i32
    %326 = tpu.dynamic_rotate %317 by %c7_i32_204 dim 1 : vector<8x128xf32>, i32 -> vector<8x128xf32>
    %c2_205 = arith.constant 2 : index
    %c0_206 = arith.constant 0 : index
    %327 = vector.load %arg4[%c2_205, %c0_206] : memref<9x128xf32, #tpu.memory_space<vmem>>, vector<1x128xf32>
    %328 = vector.broadcast %327 : vector<1x128xf32> to vector<8x128xf32>
    %329 = arith.mulf %326, %328 : vector<8x128xf32>
    %c1_i32_207 = arith.constant 1 : i32
    %330 = tpu.dynamic_rotate %317 by %c1_i32_207 dim 1 : vector<8x128xf32>, i32 -> vector<8x128xf32>
    %c3_208 = arith.constant 3 : index
    %c0_209 = arith.constant 0 : index
    %331 = vector.load %arg4[%c3_208, %c0_209] : memref<9x128xf32, #tpu.memory_space<vmem>>, vector<1x128xf32>
    %332 = vector.broadcast %331 : vector<1x128xf32> to vector<8x128xf32>
    %333 = arith.mulf %330, %332 : vector<8x128xf32>
    %c127_i32_210 = arith.constant 127 : i32
    %334 = tpu.dynamic_rotate %317 by %c127_i32_210 dim 1 : vector<8x128xf32>, i32 -> vector<8x128xf32>
    %c5_211 = arith.constant 5 : index
    %c0_212 = arith.constant 0 : index
    %335 = vector.load %arg4[%c5_211, %c0_212] : memref<9x128xf32, #tpu.memory_space<vmem>>, vector<1x128xf32>
    %336 = vector.broadcast %335 : vector<1x128xf32> to vector<8x128xf32>
    %337 = arith.mulf %334, %336 : vector<8x128xf32>
    %c121_i32_213 = arith.constant 121 : i32
    %338 = tpu.dynamic_rotate %317 by %c121_i32_213 dim 1 : vector<8x128xf32>, i32 -> vector<8x128xf32>
    %c6_214 = arith.constant 6 : index
    %c0_215 = arith.constant 0 : index
    %339 = vector.load %arg4[%c6_214, %c0_215] : memref<9x128xf32, #tpu.memory_space<vmem>>, vector<1x128xf32>
    %340 = vector.broadcast %339 : vector<1x128xf32> to vector<8x128xf32>
    %341 = arith.mulf %338, %340 : vector<8x128xf32>
    %c120_i32_216 = arith.constant 120 : i32
    %342 = tpu.dynamic_rotate %317 by %c120_i32_216 dim 1 : vector<8x128xf32>, i32 -> vector<8x128xf32>
    %c7_217 = arith.constant 7 : index
    %c0_218 = arith.constant 0 : index
    %343 = vector.load %arg4[%c7_217, %c0_218] : memref<9x128xf32, #tpu.memory_space<vmem>>, vector<1x128xf32>
    %344 = vector.broadcast %343 : vector<1x128xf32> to vector<8x128xf32>
    %345 = arith.mulf %342, %344 : vector<8x128xf32>
    %c119_i32_219 = arith.constant 119 : i32
    %346 = tpu.dynamic_rotate %317 by %c119_i32_219 dim 1 : vector<8x128xf32>, i32 -> vector<8x128xf32>
    %c8_220 = arith.constant 8 : index
    %c0_221 = arith.constant 0 : index
    %347 = vector.load %arg4[%c8_220, %c0_221] : memref<9x128xf32, #tpu.memory_space<vmem>>, vector<1x128xf32>
    %348 = vector.broadcast %347 : vector<1x128xf32> to vector<8x128xf32>
    %349 = arith.mulf %346, %348 : vector<8x128xf32>
    %350 = tpu.concatenate %236, %240, %244, %248, %231, %252, %256, %260, %264, %321, %325, %329, %333, %317, %337, %341 in 0 : vector<8x128xf32>, vector<8x128xf32>, vector<8x128xf32>, vector<8x128xf32>, vector<8x128xf32>, vector<8x128xf32>, vector<8x128xf32>, vector<8x128xf32>, vector<8x128xf32>, vector<8x128xf32>, vector<8x128xf32>, vector<8x128xf32>, vector<8x128xf32>, vector<8x128xf32>, vector<8x128xf32>, vector<8x128xf32> -> vector<128x128xf32>
    %351 = tpu.concatenate %345, %349 in 0 : vector<8x128xf32>, vector<8x128xf32> -> vector<16x128xf32>
    %352 = tpu.concatenate %350, %351 in 0 : vector<128x128xf32>, vector<16x128xf32> -> vector<144x128xf32>
    %353 = arith.truncf %352 : vector<144x128xf32> to vector<144x128xbf16>
    %c0_222 = arith.constant 0 : index
    %c0_223 = arith.constant 0 : index
    %354 = vector.load %arg15[%c0_222, %c0_223] : memref<16x144xbf16, #tpu.memory_space<vmem>>, vector<16x144xbf16>
    %cst_224 = arith.constant dense<0.000000e+00> : vector<16x128xf32>
    %355 = tpu.matmul %354, %353, %cst_224 {dimension_numbers = #tpu.dot_dimension_numbers<[1], [0], [0], [1], [0, 0, 1, 1], [], []>} : vector<16x144xbf16>, vector<144x128xbf16>, vector<16x128xf32> -> vector<16x128xf32>
    %356 = vector.extract_strided_slice %355 {offsets = [0, 0], sizes = [8, 128], strides = [1, 1]} : vector<16x128xf32> to vector<8x128xf32>
    %c0_225 = arith.constant 0 : index
    %c0_226 = arith.constant 0 : index
    %357 = vector.load %arg16[%c0_225, %c0_226] : memref<8x128xf32, #tpu.memory_space<vmem>>, vector<8x128xf32>
    %358 = arith.addf %356, %357 : vector<8x128xf32>
    %cst_227 = arith.constant 1.000000e+00 : f32
    %359 = vector.broadcast %cst_227 : f32 to vector<8x128xf32>
    %360 = arith.subf %359, %310 : vector<8x128xf32>
    %361 = arith.mulf %360, %3 : vector<8x128xf32>
    %362 = math.tanh %358 : vector<8x128xf32>
    %363 = arith.mulf %310, %362 : vector<8x128xf32>
    %364 = arith.addf %361, %363 : vector<8x128xf32>
    %c0_228 = arith.constant 0 : index
    %c0_229 = arith.constant 0 : index
    %365 = vector.load %arg21[%c0_228, %c0_229] : memref<8x128xf32, #tpu.memory_space<vmem>>, vector<8x128xf32>
    tpu.vector_store %arg21[%c0_228, %c0_229], %364 {strides = array<i32>} : memref<8x128xf32, #tpu.memory_space<vmem>>, vector<8x128xf32>,
    %c9_i32_230 = arith.constant 9 : i32
    %366 = tpu.dynamic_rotate %364 by %c9_i32_230 dim 1 : vector<8x128xf32>, i32 -> vector<8x128xf32>
    %c0_231 = arith.constant 0 : index
    %c0_232 = arith.constant 0 : index
    %367 = vector.load %arg4[%c0_231, %c0_232] : memref<9x128xf32, #tpu.memory_space<vmem>>, vector<1x128xf32>
    %368 = vector.broadcast %367 : vector<1x128xf32> to vector<8x128xf32>
    %369 = arith.mulf %366, %368 : vector<8x128xf32>
    %c8_i32_233 = arith.constant 8 : i32
    %370 = tpu.dynamic_rotate %364 by %c8_i32_233 dim 1 : vector<8x128xf32>, i32 -> vector<8x128xf32>
    %c1_234 = arith.constant 1 : index
    %c0_235 = arith.constant 0 : index
    %371 = vector.load %arg4[%c1_234, %c0_235] : memref<9x128xf32, #tpu.memory_space<vmem>>, vector<1x128xf32>
    %372 = vector.broadcast %371 : vector<1x128xf32> to vector<8x128xf32>
    %373 = arith.mulf %370, %372 : vector<8x128xf32>
    %c7_i32_236 = arith.constant 7 : i32
    %374 = tpu.dynamic_rotate %364 by %c7_i32_236 dim 1 : vector<8x128xf32>, i32 -> vector<8x128xf32>
    %c2_237 = arith.constant 2 : index
    %c0_238 = arith.constant 0 : index
    %375 = vector.load %arg4[%c2_237, %c0_238] : memref<9x128xf32, #tpu.memory_space<vmem>>, vector<1x128xf32>
    %376 = vector.broadcast %375 : vector<1x128xf32> to vector<8x128xf32>
    %377 = arith.mulf %374, %376 : vector<8x128xf32>
    %c1_i32_239 = arith.constant 1 : i32
    %378 = tpu.dynamic_rotate %364 by %c1_i32_239 dim 1 : vector<8x128xf32>, i32 -> vector<8x128xf32>
    %c3_240 = arith.constant 3 : index
    %c0_241 = arith.constant 0 : index
    %379 = vector.load %arg4[%c3_240, %c0_241] : memref<9x128xf32, #tpu.memory_space<vmem>>, vector<1x128xf32>
    %380 = vector.broadcast %379 : vector<1x128xf32> to vector<8x128xf32>
    %381 = arith.mulf %378, %380 : vector<8x128xf32>
    %c127_i32_242 = arith.constant 127 : i32
    %382 = tpu.dynamic_rotate %364 by %c127_i32_242 dim 1 : vector<8x128xf32>, i32 -> vector<8x128xf32>
    %c5_243 = arith.constant 5 : index
    %c0_244 = arith.constant 0 : index
    %383 = vector.load %arg4[%c5_243, %c0_244] : memref<9x128xf32, #tpu.memory_space<vmem>>, vector<1x128xf32>
    %384 = vector.broadcast %383 : vector<1x128xf32> to vector<8x128xf32>
    %385 = arith.mulf %382, %384 : vector<8x128xf32>
    %c121_i32_245 = arith.constant 121 : i32
    %386 = tpu.dynamic_rotate %364 by %c121_i32_245 dim 1 : vector<8x128xf32>, i32 -> vector<8x128xf32>
    %c6_246 = arith.constant 6 : index
    %c0_247 = arith.constant 0 : index
    %387 = vector.load %arg4[%c6_246, %c0_247] : memref<9x128xf32, #tpu.memory_space<vmem>>, vector<1x128xf32>
    %388 = vector.broadcast %387 : vector<1x128xf32> to vector<8x128xf32>
    %389 = arith.mulf %386, %388 : vector<8x128xf32>
    %c120_i32_248 = arith.constant 120 : i32
    %390 = tpu.dynamic_rotate %364 by %c120_i32_248 dim 1 : vector<8x128xf32>, i32 -> vector<8x128xf32>
    %c7_249 = arith.constant 7 : index
    %c0_250 = arith.constant 0 : index
    %391 = vector.load %arg4[%c7_249, %c0_250] : memref<9x128xf32, #tpu.memory_space<vmem>>, vector<1x128xf32>
    %392 = vector.broadcast %391 : vector<1x128xf32> to vector<8x128xf32>
    %393 = arith.mulf %390, %392 : vector<8x128xf32>
    %c119_i32_251 = arith.constant 119 : i32
    %394 = tpu.dynamic_rotate %364 by %c119_i32_251 dim 1 : vector<8x128xf32>, i32 -> vector<8x128xf32>
    %c8_252 = arith.constant 8 : index
    %c0_253 = arith.constant 0 : index
    %395 = vector.load %arg4[%c8_252, %c0_253] : memref<9x128xf32, #tpu.memory_space<vmem>>, vector<1x128xf32>
    %396 = vector.broadcast %395 : vector<1x128xf32> to vector<8x128xf32>
    %397 = arith.mulf %394, %396 : vector<8x128xf32>
    %398 = tpu.concatenate %369, %373, %377, %381, %364, %385, %389, %393, %397, %0 in 0 : vector<8x128xf32>, vector<8x128xf32>, vector<8x128xf32>, vector<8x128xf32>, vector<8x128xf32>, vector<8x128xf32>, vector<8x128xf32>, vector<8x128xf32>, vector<8x128xf32>, vector<8x128xf32> -> vector<80x128xf32>
    %399 = arith.truncf %398 : vector<80x128xf32> to vector<80x128xbf16>
    %c0_254 = arith.constant 0 : index
    %c0_255 = arith.constant 0 : index
    %400 = vector.load %arg17[%c0_254, %c0_255] : memref<16x80xbf16, #tpu.memory_space<vmem>>, vector<16x80xbf16>
    %cst_256 = arith.constant dense<0.000000e+00> : vector<16x128xf32>
    %401 = tpu.matmul %400, %399, %cst_256 {dimension_numbers = #tpu.dot_dimension_numbers<[1], [0], [0], [1], [0, 0, 1, 1], [], []>} : vector<16x80xbf16>, vector<80x128xbf16>, vector<16x128xf32> -> vector<16x128xf32>
    %402 = vector.extract_strided_slice %401 {offsets = [0, 0], sizes = [8, 128], strides = [1, 1]} : vector<16x128xf32> to vector<8x128xf32>
    %c0_257 = arith.constant 0 : index
    %c0_258 = arith.constant 0 : index
    %403 = vector.load %arg18[%c0_257, %c0_258] : memref<8x128xf32, #tpu.memory_space<vmem>>, vector<8x128xf32>
    %404 = arith.addf %402, %403 : vector<8x128xf32>
    %cst_259 = arith.constant 0.000000e+00 : f32
    %405 = vector.broadcast %cst_259 : f32 to vector<8x128xf32>
    %406 = arith.maximumf %404, %405 : vector<8x128xf32>
    %c9_i32_260 = arith.constant 9 : i32
    %407 = tpu.dynamic_rotate %406 by %c9_i32_260 dim 1 : vector<8x128xf32>, i32 -> vector<8x128xf32>
    %c0_261 = arith.constant 0 : index
    %c0_262 = arith.constant 0 : index
    %408 = vector.load %arg4[%c0_261, %c0_262] : memref<9x128xf32, #tpu.memory_space<vmem>>, vector<1x128xf32>
    %409 = vector.broadcast %408 : vector<1x128xf32> to vector<8x128xf32>
    %410 = arith.mulf %407, %409 : vector<8x128xf32>
    %c8_i32_263 = arith.constant 8 : i32
    %411 = tpu.dynamic_rotate %406 by %c8_i32_263 dim 1 : vector<8x128xf32>, i32 -> vector<8x128xf32>
    %c1_264 = arith.constant 1 : index
    %c0_265 = arith.constant 0 : index
    %412 = vector.load %arg4[%c1_264, %c0_265] : memref<9x128xf32, #tpu.memory_space<vmem>>, vector<1x128xf32>
    %413 = vector.broadcast %412 : vector<1x128xf32> to vector<8x128xf32>
    %414 = arith.mulf %411, %413 : vector<8x128xf32>
    %c7_i32_266 = arith.constant 7 : i32
    %415 = tpu.dynamic_rotate %406 by %c7_i32_266 dim 1 : vector<8x128xf32>, i32 -> vector<8x128xf32>
    %c2_267 = arith.constant 2 : index
    %c0_268 = arith.constant 0 : index
    %416 = vector.load %arg4[%c2_267, %c0_268] : memref<9x128xf32, #tpu.memory_space<vmem>>, vector<1x128xf32>
    %417 = vector.broadcast %416 : vector<1x128xf32> to vector<8x128xf32>
    %418 = arith.mulf %415, %417 : vector<8x128xf32>
    %c1_i32_269 = arith.constant 1 : i32
    %419 = tpu.dynamic_rotate %406 by %c1_i32_269 dim 1 : vector<8x128xf32>, i32 -> vector<8x128xf32>
    %c3_270 = arith.constant 3 : index
    %c0_271 = arith.constant 0 : index
    %420 = vector.load %arg4[%c3_270, %c0_271] : memref<9x128xf32, #tpu.memory_space<vmem>>, vector<1x128xf32>
    %421 = vector.broadcast %420 : vector<1x128xf32> to vector<8x128xf32>
    %422 = arith.mulf %419, %421 : vector<8x128xf32>
    %c127_i32_272 = arith.constant 127 : i32
    %423 = tpu.dynamic_rotate %406 by %c127_i32_272 dim 1 : vector<8x128xf32>, i32 -> vector<8x128xf32>
    %c5_273 = arith.constant 5 : index
    %c0_274 = arith.constant 0 : index
    %424 = vector.load %arg4[%c5_273, %c0_274] : memref<9x128xf32, #tpu.memory_space<vmem>>, vector<1x128xf32>
    %425 = vector.broadcast %424 : vector<1x128xf32> to vector<8x128xf32>
    %426 = arith.mulf %423, %425 : vector<8x128xf32>
    %c121_i32_275 = arith.constant 121 : i32
    %427 = tpu.dynamic_rotate %406 by %c121_i32_275 dim 1 : vector<8x128xf32>, i32 -> vector<8x128xf32>
    %c6_276 = arith.constant 6 : index
    %c0_277 = arith.constant 0 : index
    %428 = vector.load %arg4[%c6_276, %c0_277] : memref<9x128xf32, #tpu.memory_space<vmem>>, vector<1x128xf32>
    %429 = vector.broadcast %428 : vector<1x128xf32> to vector<8x128xf32>
    %430 = arith.mulf %427, %429 : vector<8x128xf32>
    %c120_i32_278 = arith.constant 120 : i32
    %431 = tpu.dynamic_rotate %406 by %c120_i32_278 dim 1 : vector<8x128xf32>, i32 -> vector<8x128xf32>
    %c7_279 = arith.constant 7 : index
    %c0_280 = arith.constant 0 : index
    %432 = vector.load %arg4[%c7_279, %c0_280] : memref<9x128xf32, #tpu.memory_space<vmem>>, vector<1x128xf32>
    %433 = vector.broadcast %432 : vector<1x128xf32> to vector<8x128xf32>
    %434 = arith.mulf %431, %433 : vector<8x128xf32>
    %c119_i32_281 = arith.constant 119 : i32
    %435 = tpu.dynamic_rotate %406 by %c119_i32_281 dim 1 : vector<8x128xf32>, i32 -> vector<8x128xf32>
    %c8_282 = arith.constant 8 : index
    %c0_283 = arith.constant 0 : index
    %436 = vector.load %arg4[%c8_282, %c0_283] : memref<9x128xf32, #tpu.memory_space<vmem>>, vector<1x128xf32>
    %437 = vector.broadcast %436 : vector<1x128xf32> to vector<8x128xf32>
    %438 = arith.mulf %435, %437 : vector<8x128xf32>
    %439 = tpu.concatenate %410, %414, %418, %422, %406, %426, %430, %434, %438, %0 in 0 : vector<8x128xf32>, vector<8x128xf32>, vector<8x128xf32>, vector<8x128xf32>, vector<8x128xf32>, vector<8x128xf32>, vector<8x128xf32>, vector<8x128xf32>, vector<8x128xf32>, vector<8x128xf32> -> vector<80x128xf32>
    %440 = arith.truncf %439 : vector<80x128xf32> to vector<80x128xbf16>
    %c0_284 = arith.constant 0 : index
    %c0_285 = arith.constant 0 : index
    %441 = vector.load %arg17[%c0_284, %c0_285] : memref<16x80xbf16, #tpu.memory_space<vmem>>, vector<16x80xbf16>
    %cst_286 = arith.constant dense<0.000000e+00> : vector<16x128xf32>
    %442 = tpu.matmul %441, %440, %cst_286 {dimension_numbers = #tpu.dot_dimension_numbers<[1], [0], [0], [1], [0, 0, 1, 1], [], []>} : vector<16x80xbf16>, vector<80x128xbf16>, vector<16x128xf32> -> vector<16x128xf32>
    %443 = vector.extract_strided_slice %442 {offsets = [0, 0], sizes = [8, 128], strides = [1, 1]} : vector<16x128xf32> to vector<8x128xf32>
    %c0_287 = arith.constant 0 : index
    %c0_288 = arith.constant 0 : index
    %444 = vector.load %arg18[%c0_287, %c0_288] : memref<8x128xf32, #tpu.memory_space<vmem>>, vector<8x128xf32>
    %445 = arith.addf %443, %444 : vector<8x128xf32>
    %c0_289 = arith.constant 0 : index
    %c0_290 = arith.constant 0 : index
    %446 = vector.load %arg19[%c0_289, %c0_290] : memref<8x128xf32, #tpu.memory_space<vmem>>, vector<8x128xf32>
    tpu.vector_store %arg19[%c0_289, %c0_290], %445 {strides = array<i32>} : memref<8x128xf32, #tpu.memory_space<vmem>>, vector<8x128xf32>,
    return
  }
}

</mosaic_0001>

<llo_original>
// kernel: attn_decoder_forward.1
$region0: #{attn_decoder_forward.1}
  #allocation0 [shape = 'u32[]', space=smem, size = 0x4, offset = 0x4, fixed_abs, tag = 'smem constant byte address 0x4 - core index']
  #allocation1 [shape = 'u32[144,128]{1,0:T(1,128)}', space=vmem, size = 0x12000, scoped, tag = 'internal scratch']
  %s0 = inlined_call_operand.vmem [shape: f32[8,128], index: 0, kind: input, shape index: {}]
  %s1 = inlined_call_operand.vmem [shape: f32[8,128], index: 1, kind: input, shape index: {}, may-alias: {1,20}]
  %s2 = inlined_call_operand.vmem [shape: f32[8,128], index: 2, kind: input, shape index: {}, may-alias: {2,21}]
  %s3 = inlined_call_operand.vmem [shape: bf16[128,128], index: 3, kind: input, shape index: {}]
  %s4 = inlined_call_operand.vmem [shape: f32[9,128], index: 4, kind: input, shape index: {}]
  %s5 = inlined_call_operand.vmem [shape: bf16[16,144], index: 5, kind: input, shape index: {}]
  %s6 = inlined_call_operand.vmem [shape: f32[16,128], index: 6, kind: input, shape index: {}]
  %s7 = inlined_call_operand.vmem [shape: bf16[16,224], index: 7, kind: input, shape index: {}]
  %s8 = inlined_call_operand.vmem [shape: f32[16,128], index: 8, kind: input, shape index: {}]
  %s9 = inlined_call_operand.vmem [shape: bf16[16,224], index: 9, kind: input, shape index: {}]
  %s10 = inlined_call_operand.vmem [shape: f32[16,128], index: 10, kind: input, shape index: {}]
  %s11 = inlined_call_operand.vmem [shape: bf16[16,224], index: 11, kind: input, shape index: {}]
  %s12 = inlined_call_operand.vmem [shape: f32[8,128], index: 12, kind: input, shape index: {}]
  %s13 = inlined_call_operand.vmem [shape: bf16[16,144], index: 13, kind: input, shape index: {}]
  %s14 = inlined_call_operand.vmem [shape: f32[16,128], index: 14, kind: input, shape index: {}]
  %s15 = inlined_call_operand.vmem [shape: bf16[16,144], index: 15, kind: input, shape index: {}]
  %s16 = inlined_call_operand.vmem [shape: f32[8,128], index: 16, kind: input, shape index: {}]
  %s17 = inlined_call_operand.vmem [shape: bf16[16,80], index: 17, kind: input, shape index: {}]
  %s18 = inlined_call_operand.vmem [shape: f32[8,128], index: 18, kind: input, shape index: {}]
  %s19 = inlined_call_operand.vmem [shape: f32[8,128], index: 19, kind: output, shape index: {0}]
  %s20 = inlined_call_operand.vmem [shape: f32[8,128], index: 20, kind: output, shape index: {1}, may-alias: {1,20}]
  %s21 = inlined_call_operand.vmem [shape: f32[8,128], index: 21, kind: output, shape index: {2}, may-alias: {2,21}]
  %s22 = inlined_call_operand.vmem [shape: f32[16,128], index: 22, kind: output, shape index: {3}]
  %23 = xla_tuple %s19, %s20, %s21, %s22
  %s24 = sld [smem:[#allocation0]]
  $region110: #{attn_decoder_forward.1} parent=0
    _
  %s26 = ssub.s32 1, %s24
  %s27 = scalar_select 0, %s26, %s24
  // Predicated region
  $region2: #{attn_decoder_forward.1} parent=0 // pred_check
    _
  $region3: #{attn_decoder_forward.1} parent=0 // pred_check_branch
    %29 = sbr.rel (0) target = $region5
  $region4: #{attn_decoder_forward.1} parent=0 // pred_region
    _
  $region5: #{attn_decoder_forward.1} parent=0 // pred_fallthru
    _
  // Predicated region
  $region6: #{attn_decoder_forward.1} parent=0 // pred_check
    _
  $region7: #{attn_decoder_forward.1} parent=0 // pred_check_branch
    %31 = sbr.rel (0) target = $region9
  $region8: #{attn_decoder_forward.1} parent=0 // pred_region
    _
  $region9: #{attn_decoder_forward.1} parent=0 // pred_fallthru
    _
  // Predicated region
  $region10: #{attn_decoder_forward.1} parent=0 // pred_check
    _
  $region11: #{attn_decoder_forward.1} parent=0 // pred_check_branch
    %33 = sbr.rel (0) target = $region13
  $region12: #{attn_decoder_forward.1} parent=0 // pred_region
    _
  $region13: #{attn_decoder_forward.1} parent=0 // pred_fallthru
    _
  // Predicated region
  $region14: #{attn_decoder_forward.1} parent=0 // pred_check
    _
  $region15: #{attn_decoder_forward.1} parent=0 // pred_check_branch
    %35 = sbr.rel (0) target = $region17
  $region16: #{attn_decoder_forward.1} parent=0 // pred_region
    _
  $region17: #{attn_decoder_forward.1} parent=0 // pred_fallthru
    _
  // Predicated region
  $region18: #{attn_decoder_forward.1} parent=0 // pred_check
    _
  $region19: #{attn_decoder_forward.1} parent=0 // pred_check_branch
    %37 = sbr.rel (0) target = $region21
  $region20: #{attn_decoder_forward.1} parent=0 // pred_region
    _
  $region21: #{attn_decoder_forward.1} parent=0 // pred_fallthru
    _
  // Predicated region
  $region22: #{attn_decoder_forward.1} parent=0 // pred_check
    _
  $region23: #{attn_decoder_forward.1} parent=0 // pred_check_branch
    %39 = sbr.rel (0) target = $region25
  $region24: #{attn_decoder_forward.1} parent=0 // pred_region
    _
  $region25: #{attn_decoder_forward.1} parent=0 // pred_fallthru
    _
  // Predicated region
  $region26: #{attn_decoder_forward.1} parent=0 // pred_check
    _
  $region27: #{attn_decoder_forward.1} parent=0 // pred_check_branch
    %41 = sbr.rel (0) target = $region29
  $region28: #{attn_decoder_forward.1} parent=0 // pred_region
    _
  $region29: #{attn_decoder_forward.1} parent=0 // pred_fallthru
    _
  // Predicated region
  $region30: #{attn_decoder_forward.1} parent=0 // pred_check
    _
  $region31: #{attn_decoder_forward.1} parent=0 // pred_check_branch
    %43 = sbr.rel (0) target = $region33
  $region32: #{attn_decoder_forward.1} parent=0 // pred_region
    _
  $region33: #{attn_decoder_forward.1} parent=0 // pred_fallthru
    _
  // Predicated region
  $region34: #{attn_decoder_forward.1} parent=0 // pred_check
    _
  $region35: #{attn_decoder_forward.1} parent=0 // pred_check_branch
    %45 = sbr.rel (0) target = $region37
  $region36: #{attn_decoder_forward.1} parent=0 // pred_region
    _
  $region37: #{attn_decoder_forward.1} parent=0 // pred_fallthru
    _
  // Predicated region
  $region38: #{attn_decoder_forward.1} parent=0 // pred_check
    _
  $region39: #{attn_decoder_forward.1} parent=0 // pred_check_branch
    %47 = sbr.rel (0) target = $region41
  $region40: #{attn_decoder_forward.1} parent=0 // pred_region
    _
  $region41: #{attn_decoder_forward.1} parent=0 // pred_fallthru
    _
  // Predicated region
  $region42: #{attn_decoder_forward.1} parent=0 // pred_check
    _
  $region43: #{attn_decoder_forward.1} parent=0 // pred_check_branch
    %49 = sbr.rel (0) target = $region45
  $region44: #{attn_decoder_forward.1} parent=0 // pred_region
    _
  $region45: #{attn_decoder_forward.1} parent=0 // pred_fallthru
    _
  // Predicated region
  $region46: #{attn_decoder_forward.1} parent=0 // pred_check
    _
  $region47: #{attn_decoder_forward.1} parent=0 // pred_check_branch
    %51 = sbr.rel (0) target = $region49
  $region48: #{attn_decoder_forward.1} parent=0 // pred_region
    _
  $region49: #{attn_decoder_forward.1} parent=0 // pred_fallthru
    _
  // Predicated region
  $region50: #{attn_decoder_forward.1} parent=0 // pred_check
    _
  $region51: #{attn_decoder_forward.1} parent=0 // pred_check_branch
    %53 = sbr.rel (0) target = $region53
  $region52: #{attn_decoder_forward.1} parent=0 // pred_region
    _
  $region53: #{attn_decoder_forward.1} parent=0 // pred_fallthru
    _
  // Predicated region
  $region54: #{attn_decoder_forward.1} parent=0 // pred_check
    _
  $region55: #{attn_decoder_forward.1} parent=0 // pred_check_branch
    %55 = sbr.rel (0) target = $region57
  $region56: #{attn_decoder_forward.1} parent=0 // pred_region
    _
  $region57: #{attn_decoder_forward.1} parent=0 // pred_fallthru
    _
  // Predicated region
  $region58: #{attn_decoder_forward.1} parent=0 // pred_check
    _
  $region59: #{attn_decoder_forward.1} parent=0 // pred_check_branch
    %57 = sbr.rel (0) target = $region61
  $region60: #{attn_decoder_forward.1} parent=0 // pred_region
    _
  $region61: #{attn_decoder_forward.1} parent=0 // pred_fallthru
    _
  // Predicated region
  $region62: #{attn_decoder_forward.1} parent=0 // pred_check
    _
  $region63: #{attn_decoder_forward.1} parent=0 // pred_check_branch
    %59 = sbr.rel (0) target = $region65
  $region64: #{attn_decoder_forward.1} parent=0 // pred_region
    _
  $region65: #{attn_decoder_forward.1} parent=0 // pred_fallthru
    _
  // Predicated region
  $region66: #{attn_decoder_forward.1} parent=0 // pred_check
    _
  $region67: #{attn_decoder_forward.1} parent=0 // pred_check_branch
    %61 = sbr.rel (0) target = $region69
  $region68: #{attn_decoder_forward.1} parent=0 // pred_region
    _
  $region69: #{attn_decoder_forward.1} parent=0 // pred_fallthru
    _
  // Predicated region
  $region70: #{attn_decoder_forward.1} parent=0 // pred_check
    _
  $region71: #{attn_decoder_forward.1} parent=0 // pred_check_branch
    %63 = sbr.rel (0) target = $region73
  $region72: #{attn_decoder_forward.1} parent=0 // pred_region
    _
  $region73: #{attn_decoder_forward.1} parent=0 // pred_fallthru
    _
  // Predicated region
  $region74: #{attn_decoder_forward.1} parent=0 // pred_check
    _
  $region75: #{attn_decoder_forward.1} parent=0 // pred_check_branch
    %65 = sbr.rel (0) target = $region77
  $region76: #{attn_decoder_forward.1} parent=0 // pred_region
    _
  $region77: #{attn_decoder_forward.1} parent=0 // pred_fallthru
    _
  %v67 = vld [vmem:[%s0] sm:$0xff]
  %v68 = vld [vmem:[%s1] sm:$0xff]
  %v69 = vld [vmem:[%s2] sm:$0xff]
  %70 = vrot.lane.b32.xlu0 %v67, 9
  %v71 = vpop.permute.xlu0 %70
  %v72 = vld [vmem:[%s4] sm:$0x1]
  %v73 = vlaneseq
  %v74 = vshrl.u32 %v73, 7
  %v75 = vsub.s32 0, %v74
  %v76 = vrot.slane %v72, %v75
  %v77 = vmul.f32 %v71, %v76
  %78 = vrot.lane.b32.xlu0 %v67, 8
  %v79 = vpop.permute.xlu0 %78
  %v80 = vld [vmem:[%s4 + $0x1] sm:$0x1]
  %v81 = vlaneseq
  %v82 = vshrl.u32 %v81, 7
  %v83 = vsub.s32 0, %v82
  %v84 = vrot.slane %v80, %v83
  %v85 = vmul.f32 %v79, %v84
  %86 = vrot.lane.b32.xlu0 %v67, 7
  %v87 = vpop.permute.xlu0 %86
  %v88 = vld [vmem:[%s4 + $0x2] sm:$0x1]
  %v89 = vlaneseq
  %v90 = vshrl.u32 %v89, 7
  %v91 = vsub.s32 0, %v90
  %v92 = vrot.slane %v88, %v91
  %v93 = vmul.f32 %v87, %v92
  %94 = vrot.lane.b32.xlu0 %v67, 1
  %v95 = vpop.permute.xlu0 %94
  %v96 = vld [vmem:[%s4 + $0x3] sm:$0x1]
  %v97 = vlaneseq
  %v98 = vshrl.u32 %v97, 7
  %v99 = vsub.s32 0, %v98
  %v100 = vrot.slane %v96, %v99
  %v101 = vmul.f32 %v95, %v100
  %102 = vrot.lane.b32.xlu0 %v67, 127
  %v103 = vpop.permute.xlu0 %102
  %v104 = vld [vmem:[%s4 + $0x5] sm:$0x1]
  %v105 = vlaneseq
  %v106 = vshrl.u32 %v105, 7
  %v107 = vsub.s32 0, %v106
  %v108 = vrot.slane %v104, %v107
  %v109 = vmul.f32 %v103, %v108
  %110 = vrot.lane.b32.xlu0 %v67, 121
  %v111 = vpop.permute.xlu0 %110
  %v112 = vld [vmem:[%s4 + $0x6] sm:$0x1]
  %v113 = vlaneseq
  %v114 = vshrl.u32 %v113, 7
  %v115 = vsub.s32 0, %v114
  %v116 = vrot.slane %v112, %v115
  %v117 = vmul.f32 %v111, %v116
  %118 = vrot.lane.b32.xlu0 %v67, 120
  %v119 = vpop.permute.xlu0 %118
  %v120 = vld [vmem:[%s4 + $0x7] sm:$0x1]
  %v121 = vlaneseq
  %v122 = vshrl.u32 %v121, 7
  %v123 = vsub.s32 0, %v122
  %v124 = vrot.slane %v120, %v123
  %v125 = vmul.f32 %v119, %v124
  %126 = vrot.lane.b32.xlu0 %v67, 119
  %v127 = vpop.permute.xlu0 %126
  %v128 = vld [vmem:[%s4 + $0x8] sm:$0x1]
  %v129 = vlaneseq
  %v130 = vshrl.u32 %v129, 7
  %v131 = vsub.s32 0, %v130
  %v132 = vrot.slane %v128, %v131
  %v133 = vmul.f32 %v127, %v132
  %134 = vrot.lane.b32.xlu0 %v68, 9
  %v135 = vpop.permute.xlu0 %134
  %v136 = vmul.f32 %v135, %v76
  %137 = vrot.lane.b32.xlu0 %v68, 8
  %v138 = vpop.permute.xlu0 %137
  %v139 = vmul.f32 %v138, %v84
  %140 = vrot.lane.b32.xlu0 %v68, 7
  %v141 = vpop.permute.xlu0 %140
  %v142 = vmul.f32 %v141, %v92
  %143 = vrot.lane.b32.xlu0 %v68, 1
  %v144 = vpop.permute.xlu0 %143
  %v145 = vmul.f32 %v144, %v100
  %146 = vrot.lane.b32.xlu0 %v68, 127
  %v147 = vpop.permute.xlu0 %146
  %v148 = vmul.f32 %v147, %v108
  %149 = vrot.lane.b32.xlu0 %v68, 121
  %v150 = vpop.permute.xlu0 %149
  %v151 = vmul.f32 %v150, %v116
  %152 = vrot.lane.b32.xlu0 %v68, 120
  %v153 = vpop.permute.xlu0 %152
  %v154 = vmul.f32 %v153, %v124
  %155 = vrot.lane.b32.xlu0 %v68, 119
  %v156 = vpop.permute.xlu0 %155
  %v157 = vmul.f32 %v156, %v132
  %v158 = vpack.c.bf16 %v85, %v77
  %v159 = vpack.c.bf16 %v101, %v93
  %v160 = vpack.c.bf16 %v109, %v67
  %v161 = vpack.c.bf16 %v125, %v117
  %v162 = vpack.c.bf16 %v136, %v133
  %v163 = vpack.c.bf16 %v142, %v139
  %v164 = vpack.c.bf16 %v68, %v145
  %v165 = vpack.c.bf16 %v151, %v148
  %v166 = vpack.c.bf16 %v157, %v154
  %v167 = vld [vmem:[%s5] sm:$0xff]
  %v168 = vld [vmem:[%s5 + $0x8] sm:$0xff]
  %v169 = vld [vmem:[%s6] sm:$0xff]
  %v170 = vld [vmem:[%s6 + $0x8] sm:$0xff]
  %v173 = vunpack.c.l.b16 %v167
  %v174 = vunpack.c.h.b16 %v167
  %v175 = vunpack.c.l.b16 %v168
  %v176 = vunpack.c.h.b16 %v168
  %v177 = vpack.c.b16 %v175, %v173
  %v178 = vpack.c.b16 %v176, %v174
  %vm180 = vcmask 130048
  %v182 = vsel %vm180, %v178, 0
  %184 = vmatprep.subr.bf16.mxu0 0
  %185 = vmatpush1.bf16.msra.mxu0 %v158
  %186 = vmatprep.subr.bf16.mxu0 0
  %187 = vmatpush1.bf16.msra.mxu0 %v159
  %188 = vmatprep.subr.bf16.mxu0 0
  %189 = vmatpush1.bf16.msra.mxu0 %v160
  %190 = vmatprep.subr.bf16.mxu0 0
  %191 = vmatpush1.bf16.msra.mxu0 %v161
  %192 = vmatprep.subr.bf16.mxu0 0
  %193 = vmatpush1.bf16.msra.mxu0 %v162
  %194 = vmatprep.subr.bf16.mxu0 0
  %195 = vmatpush1.bf16.msra.mxu0 %v163
  %196 = vmatprep.subr.bf16.mxu0 0
  %197 = vmatpush1.bf16.msra.mxu0 %v164
  %198 = vmatprep.subr.bf16.mxu0 0
  %199 = vmatpush1.bf16.msra.mxu0 %v165
  %200 = vmatprep.subr.bf16.mxu0 0
  %201 = vmatpush1.bf16.msra.mxu0 %v166
  %202 = vmatprep.subr.bf16.mxu0 0
  %203 = vmatpush1.bf16.msra.mxu0 0
  %204 = vmatprep.subr.bf16.mxu0 0
  %205 = vmatpush1.bf16.msra.mxu0 0
  %206 = vmatprep.subr.bf16.mxu0 0
  %207 = vmatpush1.bf16.msra.mxu0 0
  %208 = vmatprep.subr.bf16.mxu0 0
  %209 = vmatpush1.bf16.msra.mxu0 0
  %210 = vmatprep.subr.bf16.mxu0 0
  %211 = vmatpush1.bf16.msra.mxu0 0
  %212 = vmatprep.subr.bf16.mxu0 0
  %213 = vmatpush1.bf16.msra.mxu0 0
  %214 = vmatprep.subr.bf16.mxu0 0
  %215 = vmatpush1.bf16.msra.mxu0 0
  %216 = vmatprep.mubr.bf16.mxu0 %v182
  %217 = vmatmul.mubr.bf16.gmra.mrb[0].mxu0 %v177
  %v218 = vpop.f32.mrb[0].mxu0
  %v219 = vadd.f32 %v169, %v218
  %v220 = vpop.f32.mrb[0].mxu0
  %v221 = vpop.f32.mrb[0].mxu0
  %v222 = vadd.f32 %v170, %v221
  %v223 = vpop.f32.mrb[0].mxu0
  %224 = vdwg.mxu0
  %v225 = vmax.f32 %v219, %v222
  %v226 = vrot.slane %v225, 4
  %v227 = vmax.f32 %v225, %v226
  %v228 = vrot.slane %v227, 2
  %v229 = vmax.f32 %v227, %v228
  %v230 = vrot.slane %v229, 1
  %v231 = vmax.f32 %v229, %v230
  %v232 = vsub.f32 %v219, %v231
  %v233 = vsub.f32 %v222, %v231
  %v234 = vmul.f32 %v232, 1.442695
  %v235 = vpow.pop %v234
  %v236 = vmul.f32 %v233, 1.442695
  %v237 = vpow.pop %v236
  %v238 = vadd.f32 %v235, %v237
  %v239 = vrot.slane %v238, 4
  %v240 = vadd.f32 %v238, %v239
  %v241 = vrot.slane %v240, 2
  %v242 = vadd.f32 %v240, %v241
  %v243 = vrot.slane %v242, 1
  %v244 = vadd.f32 %v242, %v243
  %v245 = vrcp.pop %v244
  %v246 = vmul.f32 %v235, %v245
  %v247 = vmul.f32 %v237, %v245
  %248 = vst [vmem:[%s22] sm:$0xff] %v246
  %249 = vst [vmem:[%s22 + $0x8] sm:$0xff] %v247
  %v250 = vpack.c.bf16 %v247, %v246
  %v251 = vld [vmem:[%s3] sm:$0xf]
  %v252 = vld [vmem:[%s3 + $0x4] sm:$0xf]
  %v253 = vld [vmem:[%s3 + $0x8] sm:$0xf]
  %v254 = vld [vmem:[%s3 + $0xc] sm:$0xf]
  %v255 = vld [vmem:[%s3 + $0x10] sm:$0xf]
  %v256 = vld [vmem:[%s3 + $0x14] sm:$0xf]
  %v257 = vld [vmem:[%s3 + $0x18] sm:$0xf]
  %v258 = vld [vmem:[%s3 + $0x1c] sm:$0xf]
  %v259 = vld [vmem:[%s3 + $0x20] sm:$0xf]
  %v260 = vld [vmem:[%s3 + $0x24] sm:$0xf]
  %v261 = vld [vmem:[%s3 + $0x28] sm:$0xf]
  %v262 = vld [vmem:[%s3 + $0x2c] sm:$0xf]
  %v263 = vld [vmem:[%s3 + $0x30] sm:$0xf]
  %v264 = vld [vmem:[%s3 + $0x34] sm:$0xf]
  %v265 = vld [vmem:[%s3 + $0x38] sm:$0xf]
  %v266 = vld [vmem:[%s3 + $0x3c] sm:$0xf]
  %v283 = vunpack.c.l.b16 %v251
  %v284 = vunpack.c.l.b16 %v252
  %v285 = vunpack.c.l.b16 %v253
  %v286 = vunpack.c.l.b16 %v254
  %v287 = vunpack.c.l.b16 %v255
  %v288 = vunpack.c.l.b16 %v256
  %v289 = vunpack.c.l.b16 %v257
  %v290 = vunpack.c.l.b16 %v258
  %v291 = vunpack.c.l.b16 %v259
  %v292 = vunpack.c.l.b16 %v260
  %v293 = vunpack.c.l.b16 %v261
  %v294 = vunpack.c.l.b16 %v262
  %v295 = vunpack.c.l.b16 %v263
  %v296 = vunpack.c.l.b16 %v264
  %v297 = vunpack.c.l.b16 %v265
  %v298 = vunpack.c.l.b16 %v266
  %v299 = vpack.c.b16 %v284, %v283
  %v300 = vpack.c.b16 %v286, %v285
  %v301 = vpack.c.b16 %v288, %v287
  %v302 = vpack.c.b16 %v290, %v289
  %v303 = vpack.c.b16 %v292, %v291
  %v304 = vpack.c.b16 %v294, %v293
  %v305 = vpack.c.b16 %v296, %v295
  %v306 = vpack.c.b16 %v298, %v297
  %315 = vmatprep.subr.bf16.mxu0 0
  %316 = vmatpush1.bf16.msra.mxu0 %v299
  %317 = vmatprep.subr.bf16.mxu0 0
  %318 = vmatpush1.bf16.msra.mxu0 %v300
  %319 = vmatprep.subr.bf16.mxu0 0
  %320 = vmatpush1.bf16.msra.mxu0 %v301
  %321 = vmatprep.subr.bf16.mxu0 0
  %322 = vmatpush1.bf16.msra.mxu0 %v302
  %323 = vmatprep.subr.bf16.mxu0 0
  %324 = vmatpush1.bf16.msra.mxu0 %v303
  %325 = vmatprep.subr.bf16.mxu0 0
  %326 = vmatpush1.bf16.msra.mxu0 %v304
  %327 = vmatprep.subr.bf16.mxu0 0
  %328 = vmatpush1.bf16.msra.mxu0 %v305
  %329 = vmatprep.subr.bf16.mxu0 0
  %330 = vmatpush1.bf16.msra.mxu0 %v306
  %331 = vmatprep.subr.bf16.mxu0 0
  %332 = vmatpush1.bf16.msra.mxu0 0
  %333 = vmatprep.subr.bf16.mxu0 0
  %334 = vmatpush1.bf16.msra.mxu0 0
  %335 = vmatprep.subr.bf16.mxu0 0
  %336 = vmatpush1.bf16.msra.mxu0 0
  %337 = vmatprep.subr.bf16.mxu0 0
  %338 = vmatpush1.bf16.msra.mxu0 0
  %339 = vmatprep.subr.bf16.mxu0 0
  %340 = vmatpush1.bf16.msra.mxu0 0
  %341 = vmatprep.subr.bf16.mxu0 0
  %342 = vmatpush1.bf16.msra.mxu0 0
  %343 = vmatprep.subr.bf16.mxu0 0
  %344 = vmatpush1.bf16.msra.mxu0 0
  %345 = vmatprep.subr.bf16.mxu0 0
  %346 = vmatpush1.bf16.msra.mxu0 0
  %347 = vmatprep.mubr.bf16.mxu0 0
  %348 = vmatmul.mubr.bf16.gmra.mrb[0].mxu0 %v250
  %v349 = vpop.f32.mrb[0].mxu0
  %v350 = vadd.f32 0.0, %v349
  %v351 = vpop.f32.mrb[0].mxu0
  %v352 = vpop.f32.mrb[0].mxu0
  %v353 = vadd.f32 0.0, %v352
  %v354 = vpop.f32.mrb[0].mxu0
  %355 = vdwg.mxu0
  %356 = vrot.lane.b32.xlu0 %v350, 9
  %v357 = vpop.permute.xlu0 %356
  %358 = vrot.lane.b32.xlu0 %v353, 9
  %v359 = vpop.permute.xlu0 %358
  %v360 = vld [vmem:[%s4] sm:$0x1]
  %v361 = vlaneseq
  %v362 = vshrl.u32 %v361, 7
  %v363 = vsub.s32 0, %v362
  %v364 = vrot.slane %v360, %v363
  %v365 = vmul.f32 %v357, %v364
  %v366 = vmul.f32 %v359, %v364
  %367 = vrot.lane.b32.xlu0 %v350, 8
  %v368 = vpop.permute.xlu0 %367
  %369 = vrot.lane.b32.xlu0 %v353, 8
  %v370 = vpop.permute.xlu0 %369
  %v371 = vld [vmem:[%s4 + $0x1] sm:$0x1]
  %v372 = vlaneseq
  %v373 = vshrl.u32 %v372, 7
  %v374 = vsub.s32 0, %v373
  %v375 = vrot.slane %v371, %v374
  %v376 = vmul.f32 %v368, %v375
  %v377 = vmul.f32 %v370, %v375
  %378 = vrot.lane.b32.xlu0 %v350, 7
  %v379 = vpop.permute.xlu0 %378
  %380 = vrot.lane.b32.xlu0 %v353, 7
  %v381 = vpop.permute.xlu0 %380
  %v382 = vld [vmem:[%s4 + $0x2] sm:$0x1]
  %v383 = vlaneseq
  %v384 = vshrl.u32 %v383, 7
  %v385 = vsub.s32 0, %v384
  %v386 = vrot.slane %v382, %v385
  %v387 = vmul.f32 %v379, %v386
  %v388 = vmul.f32 %v381, %v386
  %389 = vrot.lane.b32.xlu0 %v350, 1
  %v390 = vpop.permute.xlu0 %389
  %391 = vrot.lane.b32.xlu0 %v353, 1
  %v392 = vpop.permute.xlu0 %391
  %v393 = vld [vmem:[%s4 + $0x3] sm:$0x1]
  %v394 = vlaneseq
  %v395 = vshrl.u32 %v394, 7
  %v396 = vsub.s32 0, %v395
  %v397 = vrot.slane %v393, %v396
  %v398 = vmul.f32 %v390, %v397
  %v399 = vmul.f32 %v392, %v397
  %400 = vrot.lane.b32.xlu0 %v350, 127
  %v401 = vpop.permute.xlu0 %400
  %402 = vrot.lane.b32.xlu0 %v353, 127
  %v403 = vpop.permute.xlu0 %402
  %v404 = vld [vmem:[%s4 + $0x5] sm:$0x1]
  %v405 = vlaneseq
  %v406 = vshrl.u32 %v405, 7
  %v407 = vsub.s32 0, %v406
  %v408 = vrot.slane %v404, %v407
  %v409 = vmul.f32 %v401, %v408
  %v410 = vmul.f32 %v403, %v408
  %411 = vrot.lane.b32.xlu0 %v350, 121
  %v412 = vpop.permute.xlu0 %411
  %413 = vrot.lane.b32.xlu0 %v353, 121
  %v414 = vpop.permute.xlu0 %413
  %v415 = vld [vmem:[%s4 + $0x6] sm:$0x1]
  %v416 = vlaneseq
  %v417 = vshrl.u32 %v416, 7
  %v418 = vsub.s32 0, %v417
  %v419 = vrot.slane %v415, %v418
  %v420 = vmul.f32 %v412, %v419
  %v421 = vmul.f32 %v414, %v419
  %422 = vrot.lane.b32.xlu0 %v350, 120
  %v423 = vpop.permute.xlu0 %422
  %424 = vrot.lane.b32.xlu0 %v353, 120
  %v425 = vpop.permute.xlu0 %424
  %v426 = vld [vmem:[%s4 + $0x7] sm:$0x1]
  %v427 = vlaneseq
  %v428 = vshrl.u32 %v427, 7
  %v429 = vsub.s32 0, %v428
  %v430 = vrot.slane %v426, %v429
  %v431 = vmul.f32 %v423, %v430
  %v432 = vmul.f32 %v425, %v430
  %433 = vrot.lane.b32.xlu0 %v350, 119
  %v434 = vpop.permute.xlu0 %433
  %435 = vrot.lane.b32.xlu0 %v353, 119
  %v436 = vpop.permute.xlu0 %435
  %v437 = vld [vmem:[%s4 + $0x8] sm:$0x1]
  %v438 = vlaneseq
  %v439 = vshrl.u32 %v438, 7
  %v440 = vsub.s32 0, %v439
  %v441 = vrot.slane %v437, %v440
  %v442 = vmul.f32 %v434, %v441
  %v443 = vmul.f32 %v436, %v441
  %v444 = vpack.c.bf16 %v365, %v133
  %v445 = vpack.c.bf16 %v376, %v366
  %v446 = vpack.c.bf16 %v387, %v377
  %v447 = vpack.c.bf16 %v398, %v388
  %v448 = vpack.c.bf16 %v350, %v399
  %v449 = vpack.c.bf16 %v409, %v353
  %v450 = vpack.c.bf16 %v420, %v410
  %v451 = vpack.c.bf16 %v431, %v421
  %v452 = vpack.c.bf16 %v442, %v432
  %v453 = vpack.c.bf16 0.0, %v443
  %v454 = vld [vmem:[%s7] sm:$0xff]
  %v455 = vld [vmem:[%s7 + $0x8] sm:$0xff]
  %v456 = vld [vmem:[%s8] sm:$0xff]
  %v457 = vld [vmem:[%s8 + $0x8] sm:$0xff]
  %v460 = vunpack.c.l.b16 %v454
  %v461 = vunpack.c.h.b16 %v454
  %v462 = vunpack.c.l.b16 %v455
  %v463 = vunpack.c.h.b16 %v455
  %v464 = vpack.c.b16 %v462, %v460
  %v465 = vpack.c.b16 %v463, %v461
  %vm467 = vcmask 785408
  %v469 = vsel %vm467, %v465, 0
  %471 = vmatprep.subr.bf16.mxu0 0
  %472 = vmatpush1.bf16.msra.mxu0 %v158
  %473 = vmatprep.subr.bf16.mxu0 0
  %474 = vmatpush1.bf16.msra.mxu0 %v159
  %475 = vmatprep.subr.bf16.mxu0 0
  %476 = vmatpush1.bf16.msra.mxu0 %v160
  %477 = vmatprep.subr.bf16.mxu0 0
  %478 = vmatpush1.bf16.msra.mxu0 %v161
  %479 = vmatprep.subr.bf16.mxu0 0
  %480 = vmatpush1.bf16.msra.mxu0 %v444
  %481 = vmatprep.subr.bf16.mxu0 0
  %482 = vmatpush1.bf16.msra.mxu0 %v445
  %483 = vmatprep.subr.bf16.mxu0 0
  %484 = vmatpush1.bf16.msra.mxu0 %v446
  %485 = vmatprep.subr.bf16.mxu0 0
  %486 = vmatpush1.bf16.msra.mxu0 %v447
  %487 = vmatprep.subr.bf16.mxu0 0
  %488 = vmatpush1.bf16.msra.mxu0 %v448
  %489 = vmatprep.subr.bf16.mxu0 0
  %490 = vmatpush1.bf16.msra.mxu0 %v449
  %491 = vmatprep.subr.bf16.mxu0 0
  %492 = vmatpush1.bf16.msra.mxu0 %v450
  %493 = vmatprep.subr.bf16.mxu0 0
  %494 = vmatpush1.bf16.msra.mxu0 %v451
  %495 = vmatprep.subr.bf16.mxu0 0
  %496 = vmatpush1.bf16.msra.mxu0 %v452
  %497 = vmatprep.subr.bf16.mxu0 0
  %498 = vmatpush1.bf16.msra.mxu0 %v453
  %499 = vmatprep.subr.bf16.mxu0 0
  %500 = vmatpush1.bf16.msra.mxu0 0
  %501 = vmatprep.subr.bf16.mxu0 0
  %502 = vmatpush1.bf16.msra.mxu0 0
  %503 = vmatprep.mubr.bf16.mxu0 %v469
  %504 = vmatmul.mubr.bf16.gmra.mrb[0].mxu0 %v464
  %v505 = vpop.f32.mrb[0].mxu0
  %v506 = vadd.f32 %v456, %v505
  %v507 = vpop.f32.mrb[0].mxu0
  %v508 = vpop.f32.mrb[0].mxu0
  %v509 = vadd.f32 %v457, %v508
  %v510 = vpop.f32.mrb[0].mxu0
  %511 = vdwg.mxu0
  %v512 = vmax.f32 %v506, 0.0
  %v513 = vmax.f32 %v509, 0.0
  %514 = vrot.lane.b32.xlu0 %v512, 9
  %v515 = vpop.permute.xlu0 %514
  %516 = vrot.lane.b32.xlu0 %v513, 9
  %v517 = vpop.permute.xlu0 %516
  %v518 = vmul.f32 %v515, %v364
  %v519 = vmul.f32 %v517, %v364
  %520 = vrot.lane.b32.xlu0 %v512, 8
  %v521 = vpop.permute.xlu0 %520
  %522 = vrot.lane.b32.xlu0 %v513, 8
  %v523 = vpop.permute.xlu0 %522
  %v524 = vmul.f32 %v521, %v375
  %v525 = vmul.f32 %v523, %v375
  %526 = vrot.lane.b32.xlu0 %v512, 7
  %v527 = vpop.permute.xlu0 %526
  %528 = vrot.lane.b32.xlu0 %v513, 7
  %v529 = vpop.permute.xlu0 %528
  %v530 = vmul.f32 %v527, %v386
  %v531 = vmul.f32 %v529, %v386
  %532 = vrot.lane.b32.xlu0 %v512, 1
  %v533 = vpop.permute.xlu0 %532
  %534 = vrot.lane.b32.xlu0 %v513, 1
  %v535 = vpop.permute.xlu0 %534
  %v536 = vmul.f32 %v533, %v397
  %v537 = vmul.f32 %v535, %v397
  %538 = vrot.lane.b32.xlu0 %v512, 127
  %v539 = vpop.permute.xlu0 %538
  %540 = vrot.lane.b32.xlu0 %v513, 127
  %v541 = vpop.permute.xlu0 %540
  %v542 = vmul.f32 %v539, %v408
  %v543 = vmul.f32 %v541, %v408
  %544 = vrot.lane.b32.xlu0 %v512, 121
  %v545 = vpop.permute.xlu0 %544
  %546 = vrot.lane.b32.xlu0 %v513, 121
  %v547 = vpop.permute.xlu0 %546
  %v548 = vmul.f32 %v545, %v419
  %v549 = vmul.f32 %v547, %v419
  %550 = vrot.lane.b32.xlu0 %v512, 120
  %v551 = vpop.permute.xlu0 %550
  %552 = vrot.lane.b32.xlu0 %v513, 120
  %v553 = vpop.permute.xlu0 %552
  %v554 = vmul.f32 %v551, %v430
  %v555 = vmul.f32 %v553, %v430
  %556 = vrot.lane.b32.xlu0 %v512, 119
  %v557 = vpop.permute.xlu0 %556
  %558 = vrot.lane.b32.xlu0 %v513, 119
  %v559 = vpop.permute.xlu0 %558
  %v560 = vmul.f32 %v557, %v441
  %v561 = vmul.f32 %v559, %v441
  %v562 = vpack.c.bf16 %v519, %v518
  %v563 = vpack.c.bf16 %v525, %v524
  %v564 = vpack.c.bf16 %v531, %v530
  %v565 = vpack.c.bf16 %v537, %v536
  %v566 = vpack.c.bf16 %v513, %v512
  %v567 = vpack.c.bf16 %v543, %v542
  %v568 = vpack.c.bf16 %v549, %v548
  %v569 = vpack.c.bf16 %v555, %v554
  %v570 = vpack.c.bf16 %v561, %v560
  %v571 = vpack.c.bf16 %v139, %v136
  %v572 = vpack.c.bf16 %v145, %v142
  %v573 = vpack.c.bf16 %v148, %v68
  %v574 = vpack.c.bf16 %v154, %v151
  %v575 = vpack.c.bf16 0.0, %v157
  %v576 = vld [vmem:[%s9] sm:$0xff]
  %v577 = vld [vmem:[%s9 + $0x8] sm:$0xff]
  %v578 = vld [vmem:[%s10] sm:$0xff]
  %v579 = vld [vmem:[%s10 + $0x8] sm:$0xff]
  %v582 = vunpack.c.l.b16 %v576
  %v583 = vunpack.c.h.b16 %v576
  %v584 = vunpack.c.l.b16 %v577
  %v585 = vunpack.c.h.b16 %v577
  %v586 = vpack.c.b16 %v584, %v582
  %v587 = vpack.c.b16 %v585, %v583
  %v590 = vsel %vm467, %v587, 0
  %592 = vmatprep.subr.bf16.mxu0 0
  %593 = vmatpush1.bf16.msra.mxu0 %v562
  %594 = vmatprep.subr.bf16.mxu0 0
  %595 = vmatpush1.bf16.msra.mxu0 %v563
  %596 = vmatprep.subr.bf16.mxu0 0
  %597 = vmatpush1.bf16.msra.mxu0 %v564
  %598 = vmatprep.subr.bf16.mxu0 0
  %599 = vmatpush1.bf16.msra.mxu0 %v565
  %600 = vmatprep.subr.bf16.mxu0 0
  %601 = vmatpush1.bf16.msra.mxu0 %v566
  %602 = vmatprep.subr.bf16.mxu0 0
  %603 = vmatpush1.bf16.msra.mxu0 %v567
  %604 = vmatprep.subr.bf16.mxu0 0
  %605 = vmatpush1.bf16.msra.mxu0 %v568
  %606 = vmatprep.subr.bf16.mxu0 0
  %607 = vmatpush1.bf16.msra.mxu0 %v569
  %608 = vmatprep.subr.bf16.mxu0 0
  %609 = vmatpush1.bf16.msra.mxu0 %v570
  %610 = vmatprep.subr.bf16.mxu0 0
  %611 = vmatpush1.bf16.msra.mxu0 %v571
  %612 = vmatprep.subr.bf16.mxu0 0
  %613 = vmatpush1.bf16.msra.mxu0 %v572
  %614 = vmatprep.subr.bf16.mxu0 0
  %615 = vmatpush1.bf16.msra.mxu0 %v573
  %616 = vmatprep.subr.bf16.mxu0 0
  %617 = vmatpush1.bf16.msra.mxu0 %v574
  %618 = vmatprep.subr.bf16.mxu0 0
  %619 = vmatpush1.bf16.msra.mxu0 %v575
  %620 = vmatprep.subr.bf16.mxu0 0
  %621 = vmatpush1.bf16.msra.mxu0 0
  %622 = vmatprep.subr.bf16.mxu0 0
  %623 = vmatpush1.bf16.msra.mxu0 0
  %624 = vmatprep.mubr.bf16.mxu0 %v590
  %625 = vmatmul.mubr.bf16.gmra.mrb[0].mxu0 %v586
  %v626 = vpop.f32.mrb[0].mxu0
  %v627 = vadd.f32 %v578, %v626
  %v628 = vpop.f32.mrb[0].mxu0
  %v629 = vpop.f32.mrb[0].mxu0
  %v630 = vadd.f32 %v579, %v629
  %v631 = vpop.f32.mrb[0].mxu0
  %632 = vdwg.mxu0
  %v633 = vxor.u32 %v627, 2147483648
  %v634 = vmul.f32 %v633, 1.442695
  %v635 = vpow.pop %v634
  %v636 = vadd.f32 %v635, 1.0
  %v637 = vrcp.pop %v636
  %v638 = vmul.f32 1.0, %v637
  %v639 = vxor.u32 %v630, 2147483648
  %v640 = vmul.f32 %v639, 1.442695
  %v641 = vpow.pop %v640
  %v642 = vadd.f32 %v641, 1.0
  %v643 = vrcp.pop %v642
  %v644 = vmul.f32 1.0, %v643
  %v645 = vmul.f32 %v644, %v68
  %646 = vrot.lane.b32.xlu0 %v645, 9
  %v647 = vpop.permute.xlu0 %646
  %v648 = vmul.f32 %v647, %v364
  %649 = vrot.lane.b32.xlu0 %v645, 8
  %v650 = vpop.permute.xlu0 %649
  %v651 = vmul.f32 %v650, %v375
  %652 = vrot.lane.b32.xlu0 %v645, 7
  %v653 = vpop.permute.xlu0 %652
  %v654 = vmul.f32 %v653, %v386
  %655 = vrot.lane.b32.xlu0 %v645, 1
  %v656 = vpop.permute.xlu0 %655
  %v657 = vmul.f32 %v656, %v397
  %658 = vrot.lane.b32.xlu0 %v645, 127
  %v659 = vpop.permute.xlu0 %658
  %v660 = vmul.f32 %v659, %v408
  %661 = vrot.lane.b32.xlu0 %v645, 121
  %v662 = vpop.permute.xlu0 %661
  %v663 = vmul.f32 %v662, %v419
  %664 = vrot.lane.b32.xlu0 %v645, 120
  %v665 = vpop.permute.xlu0 %664
  %v666 = vmul.f32 %v665, %v430
  %667 = vrot.lane.b32.xlu0 %v645, 119
  %v668 = vpop.permute.xlu0 %667
  %v669 = vmul.f32 %v668, %v441
  %v670 = vpack.c.bf16 %v651, %v648
  %v671 = vpack.c.bf16 %v657, %v654
  %v672 = vpack.c.bf16 %v660, %v645
  %v673 = vpack.c.bf16 %v666, %v663
  %v674 = vpack.c.bf16 0.0, %v669
  %v675 = vld [vmem:[%s11] sm:$0xff]
  %v676 = vld [vmem:[%s11 + $0x8] sm:$0xff]
  %v679 = vunpack.c.l.b16 %v675
  %v680 = vunpack.c.h.b16 %v675
  %v681 = vunpack.c.l.b16 %v676
  %v682 = vunpack.c.h.b16 %v676
  %v683 = vpack.c.b16 %v681, %v679
  %v684 = vpack.c.b16 %v682, %v680
  %v687 = vsel %vm467, %v684, 0
  %689 = vmatprep.subr.bf16.mxu0 0
  %690 = vmatpush1.bf16.msra.mxu0 %v562
  %691 = vmatprep.subr.bf16.mxu0 0
  %692 = vmatpush1.bf16.msra.mxu0 %v563
  %693 = vmatprep.subr.bf16.mxu0 0
  %694 = vmatpush1.bf16.msra.mxu0 %v564
  %695 = vmatprep.subr.bf16.mxu0 0
  %696 = vmatpush1.bf16.msra.mxu0 %v565
  %697 = vmatprep.subr.bf16.mxu0 0
  %698 = vmatpush1.bf16.msra.mxu0 %v566
  %699 = vmatprep.subr.bf16.mxu0 0
  %700 = vmatpush1.bf16.msra.mxu0 %v567
  %701 = vmatprep.subr.bf16.mxu0 0
  %702 = vmatpush1.bf16.msra.mxu0 %v568
  %703 = vmatprep.subr.bf16.mxu0 0
  %704 = vmatpush1.bf16.msra.mxu0 %v569
  %705 = vmatprep.subr.bf16.mxu0 0
  %706 = vmatpush1.bf16.msra.mxu0 %v570
  %707 = vmatprep.subr.bf16.mxu0 0
  %708 = vmatpush1.bf16.msra.mxu0 %v670
  %709 = vmatprep.subr.bf16.mxu0 0
  %710 = vmatpush1.bf16.msra.mxu0 %v671
  %711 = vmatprep.subr.bf16.mxu0 0
  %712 = vmatpush1.bf16.msra.mxu0 %v672
  %713 = vmatprep.subr.bf16.mxu0 0
  %714 = vmatpush1.bf16.msra.mxu0 %v673
  %715 = vmatprep.subr.bf16.mxu0 0
  %716 = vmatpush1.bf16.msra.mxu0 %v674
  %717 = vmatprep.subr.bf16.mxu0 0
  %718 = vmatpush1.bf16.msra.mxu0 0
  %719 = vmatprep.subr.bf16.mxu0 0
  %720 = vmatpush1.bf16.msra.mxu0 0
  %721 = vmatprep.mubr.bf16.mxu0 %v687
  %722 = vmatmul.mubr.bf16.gmra.mrb[0].mxu0 %v683
  %v723 = vpop.f32.mrb[0].mxu0
  %v724 = vadd.f32 0.0, %v723
  %v725 = vpop.f32.mrb[0].mxu0
  %v726 = vpop.f32.mrb[0].mxu0
  %v727 = vpop.f32.mrb[0].mxu0
  %728 = vdwg.mxu0
  %v729 = vld [vmem:[%s12] sm:$0xff]
  %v730 = vadd.f32 %v724, %v729
  %v731 = vsub.f32 1.0, %v638
  %v732 = vmul.f32 %v731, %v68
  %v733 = vtanh.pop %v730
  %v734 = vmul.f32 %v638, %v733
  %v735 = vadd.f32 %v732, %v734
  %736 = vst [vmem:[%s20] sm:$0xff] %v735
  %737 = vrot.lane.b32.xlu0 %v735, 9
  %v738 = vpop.permute.xlu0 %737
  %v739 = vld [vmem:[%s4] sm:$0x1]
  %v740 = vlaneseq
  %v741 = vshrl.u32 %v740, 7
  %v742 = vsub.s32 0, %v741
  %v743 = vrot.slane %v739, %v742
  %v744 = vmul.f32 %v738, %v743
  %745 = vrot.lane.b32.xlu0 %v735, 8
  %v746 = vpop.permute.xlu0 %745
  %v747 = vld [vmem:[%s4 + $0x1] sm:$0x1]
  %v748 = vlaneseq
  %v749 = vshrl.u32 %v748, 7
  %v750 = vsub.s32 0, %v749
  %v751 = vrot.slane %v747, %v750
  %v752 = vmul.f32 %v746, %v751
  %753 = vrot.lane.b32.xlu0 %v735, 7
  %v754 = vpop.permute.xlu0 %753
  %v755 = vld [vmem:[%s4 + $0x2] sm:$0x1]
  %v756 = vlaneseq
  %v757 = vshrl.u32 %v756, 7
  %v758 = vsub.s32 0, %v757
  %v759 = vrot.slane %v755, %v758
  %v760 = vmul.f32 %v754, %v759
  %761 = vrot.lane.b32.xlu0 %v735, 1
  %v762 = vpop.permute.xlu0 %761
  %v763 = vld [vmem:[%s4 + $0x3] sm:$0x1]
  %v764 = vlaneseq
  %v765 = vshrl.u32 %v764, 7
  %v766 = vsub.s32 0, %v765
  %v767 = vrot.slane %v763, %v766
  %v768 = vmul.f32 %v762, %v767
  %769 = vrot.lane.b32.xlu0 %v735, 127
  %v770 = vpop.permute.xlu0 %769
  %v771 = vld [vmem:[%s4 + $0x5] sm:$0x1]
  %v772 = vlaneseq
  %v773 = vshrl.u32 %v772, 7
  %v774 = vsub.s32 0, %v773
  %v775 = vrot.slane %v771, %v774
  %v776 = vmul.f32 %v770, %v775
  %777 = vrot.lane.b32.xlu0 %v735, 121
  %v778 = vpop.permute.xlu0 %777
  %v779 = vld [vmem:[%s4 + $0x6] sm:$0x1]
  %v780 = vlaneseq
  %v781 = vshrl.u32 %v780, 7
  %v782 = vsub.s32 0, %v781
  %v783 = vrot.slane %v779, %v782
  %v784 = vmul.f32 %v778, %v783
  %785 = vrot.lane.b32.xlu0 %v735, 120
  %v786 = vpop.permute.xlu0 %785
  %v787 = vld [vmem:[%s4 + $0x7] sm:$0x1]
  %v788 = vlaneseq
  %v789 = vshrl.u32 %v788, 7
  %v790 = vsub.s32 0, %v789
  %v791 = vrot.slane %v787, %v790
  %v792 = vmul.f32 %v786, %v791
  %793 = vrot.lane.b32.xlu0 %v735, 119
  %v794 = vpop.permute.xlu0 %793
  %v795 = vld [vmem:[%s4 + $0x8] sm:$0x1]
  %v796 = vlaneseq
  %v797 = vshrl.u32 %v796, 7
  %v798 = vsub.s32 0, %v797
  %v799 = vrot.slane %v795, %v798
  %v800 = vmul.f32 %v794, %v799
  %801 = vrot.lane.b32.xlu0 %v69, 9
  %v802 = vpop.permute.xlu0 %801
  %v803 = vmul.f32 %v802, %v743
  %804 = vrot.lane.b32.xlu0 %v69, 8
  %v805 = vpop.permute.xlu0 %804
  %v806 = vmul.f32 %v805, %v751
  %807 = vrot.lane.b32.xlu0 %v69, 7
  %v808 = vpop.permute.xlu0 %807
  %v809 = vmul.f32 %v808, %v759
  %810 = vrot.lane.b32.xlu0 %v69, 1
  %v811 = vpop.permute.xlu0 %810
  %v812 = vmul.f32 %v811, %v767
  %813 = vrot.lane.b32.xlu0 %v69, 127
  %v814 = vpop.permute.xlu0 %813
  %v815 = vmul.f32 %v814, %v775
  %816 = vrot.lane.b32.xlu0 %v69, 121
  %v817 = vpop.permute.xlu0 %816
  %v818 = vmul.f32 %v817, %v783
  %819 = vrot.lane.b32.xlu0 %v69, 120
  %v820 = vpop.permute.xlu0 %819
  %v821 = vmul.f32 %v820, %v791
  %822 = vrot.lane.b32.xlu0 %v69, 119
  %v823 = vpop.permute.xlu0 %822
  %v824 = vmul.f32 %v823, %v799
  %v825 = vpack.c.bf16 %v752, %v744
  %v826 = vpack.c.bf16 %v768, %v760
  %v827 = vpack.c.bf16 %v776, %v735
  %v828 = vpack.c.bf16 %v792, %v784
  %v829 = vpack.c.bf16 %v803, %v800
  %v830 = vpack.c.bf16 %v809, %v806
  %v831 = vpack.c.bf16 %v69, %v812
  %v832 = vpack.c.bf16 %v818, %v815
  %v833 = vpack.c.bf16 %v824, %v821
  %v834 = vld [vmem:[%s13] sm:$0xff]
  %v835 = vld [vmem:[%s13 + $0x8] sm:$0xff]
  %v836 = vld [vmem:[%s14] sm:$0xff]
  %v837 = vld [vmem:[%s14 + $0x8] sm:$0xff]
  %v840 = vunpack.c.l.b16 %v834
  %v841 = vunpack.c.h.b16 %v834
  %v842 = vunpack.c.l.b16 %v835
  %v843 = vunpack.c.h.b16 %v835
  %v844 = vpack.c.b16 %v842, %v840
  %v845 = vpack.c.b16 %v843, %v841
  %v848 = vsel %vm180, %v845, 0
  %850 = vmatprep.subr.bf16.mxu0 0
  %851 = vmatpush1.bf16.msra.mxu0 %v825
  %852 = vmatprep.subr.bf16.mxu0 0
  %853 = vmatpush1.bf16.msra.mxu0 %v826
  %854 = vmatprep.subr.bf16.mxu0 0
  %855 = vmatpush1.bf16.msra.mxu0 %v827
  %856 = vmatprep.subr.bf16.mxu0 0
  %857 = vmatpush1.bf16.msra.mxu0 %v828
  %858 = vmatprep.subr.bf16.mxu0 0
  %859 = vmatpush1.bf16.msra.mxu0 %v829
  %860 = vmatprep.subr.bf16.mxu0 0
  %861 = vmatpush1.bf16.msra.mxu0 %v830
  %862 = vmatprep.subr.bf16.mxu0 0
  %863 = vmatpush1.bf16.msra.mxu0 %v831
  %864 = vmatprep.subr.bf16.mxu0 0
  %865 = vmatpush1.bf16.msra.mxu0 %v832
  %866 = vmatprep.subr.bf16.mxu0 0
  %867 = vmatpush1.bf16.msra.mxu0 %v833
  %868 = vmatprep.subr.bf16.mxu0 0
  %869 = vmatpush1.bf16.msra.mxu0 0
  %870 = vmatprep.subr.bf16.mxu0 0
  %871 = vmatpush1.bf16.msra.mxu0 0
  %872 = vmatprep.subr.bf16.mxu0 0
  %873 = vmatpush1.bf16.msra.mxu0 0
  %874 = vmatprep.subr.bf16.mxu0 0
  %875 = vmatpush1.bf16.msra.mxu0 0
  %876 = vmatprep.subr.bf16.mxu0 0
  %877 = vmatpush1.bf16.msra.mxu0 0
  %878 = vmatprep.subr.bf16.mxu0 0
  %879 = vmatpush1.bf16.msra.mxu0 0
  %880 = vmatprep.subr.bf16.mxu0 0
  %881 = vmatpush1.bf16.msra.mxu0 0
  %882 = vmatprep.mubr.bf16.mxu0 %v848
  %883 = vmatmul.mubr.bf16.gmra.mrb[0].mxu0 %v844
  %v884 = vpop.f32.mrb[0].mxu0
  %v885 = vadd.f32 %v836, %v884
  %v886 = vpop.f32.mrb[0].mxu0
  %v887 = vpop.f32.mrb[0].mxu0
  %v888 = vadd.f32 %v837, %v887
  %v889 = vpop.f32.mrb[0].mxu0
  %890 = vdwg.mxu0
  %v891 = vxor.u32 %v885, 2147483648
  %v892 = vmul.f32 %v891, 1.442695
  %v893 = vpow.pop %v892
  %v894 = vadd.f32 %v893, 1.0
  %v895 = vrcp.pop %v894
  %v896 = vmul.f32 1.0, %v895
  %v897 = vxor.u32 %v888, 2147483648
  %v898 = vmul.f32 %v897, 1.442695
  %v899 = vpow.pop %v898
  %v900 = vadd.f32 %v899, 1.0
  %v901 = vrcp.pop %v900
  %v902 = vmul.f32 1.0, %v901
  %v903 = vmul.f32 %v902, %v69
  %904 = vrot.lane.b32.xlu0 %v903, 9
  %v905 = vpop.permute.xlu0 %904
  %v906 = vmul.f32 %v905, %v743
  %907 = vrot.lane.b32.xlu0 %v903, 8
  %v908 = vpop.permute.xlu0 %907
  %v909 = vmul.f32 %v908, %v751
  %910 = vrot.lane.b32.xlu0 %v903, 7
  %v911 = vpop.permute.xlu0 %910
  %v912 = vmul.f32 %v911, %v759
  %913 = vrot.lane.b32.xlu0 %v903, 1
  %v914 = vpop.permute.xlu0 %913
  %v915 = vmul.f32 %v914, %v767
  %916 = vrot.lane.b32.xlu0 %v903, 127
  %v917 = vpop.permute.xlu0 %916
  %v918 = vmul.f32 %v917, %v775
  %919 = vrot.lane.b32.xlu0 %v903, 121
  %v920 = vpop.permute.xlu0 %919
  %v921 = vmul.f32 %v920, %v783
  %922 = vrot.lane.b32.xlu0 %v903, 120
  %v923 = vpop.permute.xlu0 %922
  %v924 = vmul.f32 %v923, %v791
  %925 = vrot.lane.b32.xlu0 %v903, 119
  %v926 = vpop.permute.xlu0 %925
  %v927 = vmul.f32 %v926, %v799
  %v928 = vpack.c.bf16 %v906, %v800
  %v929 = vpack.c.bf16 %v912, %v909
  %v930 = vpack.c.bf16 %v903, %v915
  %v931 = vpack.c.bf16 %v921, %v918
  %v932 = vpack.c.bf16 %v927, %v924
  %v933 = vld [vmem:[%s15] sm:$0xff]
  %v934 = vld [vmem:[%s15 + $0x8] sm:$0xff]
  %v937 = vunpack.c.l.b16 %v933
  %v938 = vunpack.c.h.b16 %v933
  %v939 = vunpack.c.l.b16 %v934
  %v940 = vunpack.c.h.b16 %v934
  %v941 = vpack.c.b16 %v939, %v937
  %v942 = vpack.c.b16 %v940, %v938
  %v945 = vsel %vm180, %v942, 0
  %947 = vmatprep.subr.bf16.mxu0 0
  %948 = vmatpush1.bf16.msra.mxu0 %v825
  %949 = vmatprep.subr.bf16.mxu0 0
  %950 = vmatpush1.bf16.msra.mxu0 %v826
  %951 = vmatprep.subr.bf16.mxu0 0
  %952 = vmatpush1.bf16.msra.mxu0 %v827
  %953 = vmatprep.subr.bf16.mxu0 0
  %954 = vmatpush1.bf16.msra.mxu0 %v828
  %955 = vmatprep.subr.bf16.mxu0 0
  %956 = vmatpush1.bf16.msra.mxu0 %v928
  %957 = vmatprep.subr.bf16.mxu0 0
  %958 = vmatpush1.bf16.msra.mxu0 %v929
  %959 = vmatprep.subr.bf16.mxu0 0
  %960 = vmatpush1.bf16.msra.mxu0 %v930
  %961 = vmatprep.subr.bf16.mxu0 0
  %962 = vmatpush1.bf16.msra.mxu0 %v931
  %963 = vmatprep.subr.bf16.mxu0 0
  %964 = vmatpush1.bf16.msra.mxu0 %v932
  %965 = vmatprep.subr.bf16.mxu0 0
  %966 = vmatpush1.bf16.msra.mxu0 0
  %967 = vmatprep.subr.bf16.mxu0 0
  %968 = vmatpush1.bf16.msra.mxu0 0
  %969 = vmatprep.subr.bf16.mxu0 0
  %970 = vmatpush1.bf16.msra.mxu0 0
  %971 = vmatprep.subr.bf16.mxu0 0
  %972 = vmatpush1.bf16.msra.mxu0 0
  %973 = vmatprep.subr.bf16.mxu0 0
  %974 = vmatpush1.bf16.msra.mxu0 0
  %975 = vmatprep.subr.bf16.mxu0 0
  %976 = vmatpush1.bf16.msra.mxu0 0
  %977 = vmatprep.subr.bf16.mxu0 0
  %978 = vmatpush1.bf16.msra.mxu0 0
  %979 = vmatprep.mubr.bf16.mxu0 %v945
  %980 = vmatmul.mubr.bf16.gmra.mrb[0].mxu0 %v941
  %v981 = vpop.f32.mrb[0].mxu0
  %v982 = vadd.f32 0.0, %v981
  %v983 = vpop.f32.mrb[0].mxu0
  %v984 = vpop.f32.mrb[0].mxu0
  %v985 = vpop.f32.mrb[0].mxu0
  %986 = vdwg.mxu0
  %v987 = vld [vmem:[%s16] sm:$0xff]
  %v988 = vadd.f32 %v982, %v987
  %v989 = vsub.f32 1.0, %v896
  %v990 = vmul.f32 %v989, %v69
  %v991 = vtanh.pop %v988
  %v992 = vmul.f32 %v896, %v991
  %v993 = vadd.f32 %v990, %v992
  %994 = vst [vmem:[%s21] sm:$0xff] %v993
  %995 = vrot.lane.b32.xlu0 %v993, 9
  %v996 = vpop.permute.xlu0 %995
  %v997 = vld [vmem:[%s4] sm:$0x1]
  %v998 = vlaneseq
  %v999 = vshrl.u32 %v998, 7
  %v1000 = vsub.s32 0, %v999
  %v1001 = vrot.slane %v997, %v1000
  %v1002 = vmul.f32 %v996, %v1001
  %1003 = vrot.lane.b32.xlu0 %v993, 8
  %v1004 = vpop.permute.xlu0 %1003
  %v1005 = vld [vmem:[%s4 + $0x1] sm:$0x1]
  %v1006 = vlaneseq
  %v1007 = vshrl.u32 %v1006, 7
  %v1008 = vsub.s32 0, %v1007
  %v1009 = vrot.slane %v1005, %v1008
  %v1010 = vmul.f32 %v1004, %v1009
  %1011 = vrot.lane.b32.xlu0 %v993, 7
  %v1012 = vpop.permute.xlu0 %1011
  %v1013 = vld [vmem:[%s4 + $0x2] sm:$0x1]
  %v1014 = vlaneseq
  %v1015 = vshrl.u32 %v1014, 7
  %v1016 = vsub.s32 0, %v1015
  %v1017 = vrot.slane %v1013, %v1016
  %v1018 = vmul.f32 %v1012, %v1017
  %1019 = vrot.lane.b32.xlu0 %v993, 1
  %v1020 = vpop.permute.xlu0 %1019
  %v1021 = vld [vmem:[%s4 + $0x3] sm:$0x1]
  %v1022 = vlaneseq
  %v1023 = vshrl.u32 %v1022, 7
  %v1024 = vsub.s32 0, %v1023
  %v1025 = vrot.slane %v1021, %v1024
  %v1026 = vmul.f32 %v1020, %v1025
  %1027 = vrot.lane.b32.xlu0 %v993, 127
  %v1028 = vpop.permute.xlu0 %1027
  %v1029 = vld [vmem:[%s4 + $0x5] sm:$0x1]
  %v1030 = vlaneseq
  %v1031 = vshrl.u32 %v1030, 7
  %v1032 = vsub.s32 0, %v1031
  %v1033 = vrot.slane %v1029, %v1032
  %v1034 = vmul.f32 %v1028, %v1033
  %1035 = vrot.lane.b32.xlu0 %v993, 121
  %v1036 = vpop.permute.xlu0 %1035
  %v1037 = vld [vmem:[%s4 + $0x6] sm:$0x1]
  %v1038 = vlaneseq
  %v1039 = vshrl.u32 %v1038, 7
  %v1040 = vsub.s32 0, %v1039
  %v1041 = vrot.slane %v1037, %v1040
  %v1042 = vmul.f32 %v1036, %v1041
  %1043 = vrot.lane.b32.xlu0 %v993, 120
  %v1044 = vpop.permute.xlu0 %1043
  %v1045 = vld [vmem:[%s4 + $0x7] sm:$0x1]
  %v1046 = vlaneseq
  %v1047 = vshrl.u32 %v1046, 7
  %v1048 = vsub.s32 0, %v1047
  %v1049 = vrot.slane %v1045, %v1048
  %v1050 = vmul.f32 %v1044, %v1049
  %1051 = vrot.lane.b32.xlu0 %v993, 119
  %v1052 = vpop.permute.xlu0 %1051
  %v1053 = vld [vmem:[%s4 + $0x8] sm:$0x1]
  %v1054 = vlaneseq
  %v1055 = vshrl.u32 %v1054, 7
  %v1056 = vsub.s32 0, %v1055
  %v1057 = vrot.slane %v1053, %v1056
  %v1058 = vmul.f32 %v1052, %v1057
  %v1059 = vpack.c.bf16 %v1010, %v1002
  %v1060 = vpack.c.bf16 %v1026, %v1018
  %v1061 = vpack.c.bf16 %v1034, %v993
  %v1062 = vpack.c.bf16 %v1050, %v1042
  %v1063 = vpack.c.bf16 0.0, %v1058
  %v1064 = vld [vmem:[%s17] sm:$0xf]
  %v1065 = vld [vmem:[%s17 + $0x4] sm:$0xf]
  %v1068 = vunpack.c.l.b16 %v1064
  %v1069 = vunpack.c.l.b16 %v1065
  %v1070 = vpack.c.b16 %v1069, %v1068
  %vm1071 = vcmask 654336
  %v1073 = vsel %vm1071, %v1070, 0
  %1075 = vmatprep.subr.bf16.mxu0 0
  %1076 = vmatpush1.bf16.msra.mxu0 %v1059
  %1077 = vmatprep.subr.bf16.mxu0 0
  %1078 = vmatpush1.bf16.msra.mxu0 %v1060
  %1079 = vmatprep.subr.bf16.mxu0 0
  %1080 = vmatpush1.bf16.msra.mxu0 %v1061
  %1081 = vmatprep.subr.bf16.mxu0 0
  %1082 = vmatpush1.bf16.msra.mxu0 %v1062
  %1083 = vmatprep.subr.bf16.mxu0 0
  %1084 = vmatpush1.bf16.msra.mxu0 %v1063
  %1085 = vmatprep.subr.bf16.mxu0 0
  %1086 = vmatpush1.bf16.msra.mxu0 0
  %1087 = vmatprep.subr.bf16.mxu0 0
  %1088 = vmatpush1.bf16.msra.mxu0 0
  %1089 = vmatprep.subr.bf16.mxu0 0
  %1090 = vmatpush1.bf16.msra.mxu0 0
  %1091 = vmatprep.subr.bf16.mxu0 0
  %1092 = vmatpush1.bf16.msra.mxu0 0
  %1093 = vmatprep.subr.bf16.mxu0 0
  %1094 = vmatpush1.bf16.msra.mxu0 0
  %1095 = vmatprep.subr.bf16.mxu0 0
  %1096 = vmatpush1.bf16.msra.mxu0 0
  %1097 = vmatprep.subr.bf16.mxu0 0
  %1098 = vmatpush1.bf16.msra.mxu0 0
  %1099 = vmatprep.subr.bf16.mxu0 0
  %1100 = vmatpush1.bf16.msra.mxu0 0
  %1101 = vmatprep.subr.bf16.mxu0 0
  %1102 = vmatpush1.bf16.msra.mxu0 0
  %1103 = vmatprep.subr.bf16.mxu0 0
  %1104 = vmatpush1.bf16.msra.mxu0 0
  %1105 = vmatprep.subr.bf16.mxu0 0
  %1106 = vmatpush1.bf16.msra.mxu0 0
  %1107 = vmatprep.mubr.bf16.mxu0 0
  %1108 = vmatmul.mubr.bf16.gmra.mrb[0].mxu0 %v1073
  %v1109 = vpop.f32.mrb[0].mxu0
  %v1110 = vadd.f32 0.0, %v1109
  %v1111 = vpop.f32.mrb[0].mxu0
  %v1112 = vpop.f32.mrb[0].mxu0
  %v1113 = vpop.f32.mrb[0].mxu0
  %1114 = vdwg.mxu0
  %v1115 = vld [vmem:[%s18] sm:$0xff]
  %v1116 = vadd.f32 %v1110, %v1115
  %v1117 = vmax.f32 %v1116, 0.0
  %1118 = vrot.lane.b32.xlu0 %v1117, 9
  %v1119 = vpop.permute.xlu0 %1118
  %v1120 = vmul.f32 %v1119, %v1001
  %1121 = vrot.lane.b32.xlu0 %v1117, 8
  %v1122 = vpop.permute.xlu0 %1121
  %v1123 = vmul.f32 %v1122, %v1009
  %1124 = vrot.lane.b32.xlu0 %v1117, 7
  %v1125 = vpop.permute.xlu0 %1124
  %v1126 = vmul.f32 %v1125, %v1017
  %1127 = vrot.lane.b32.xlu0 %v1117, 1
  %v1128 = vpop.permute.xlu0 %1127
  %v1129 = vmul.f32 %v1128, %v1025
  %1130 = vrot.lane.b32.xlu0 %v1117, 127
  %v1131 = vpop.permute.xlu0 %1130
  %v1132 = vmul.f32 %v1131, %v1033
  %1133 = vrot.lane.b32.xlu0 %v1117, 121
  %v1134 = vpop.permute.xlu0 %1133
  %v1135 = vmul.f32 %v1134, %v1041
  %1136 = vrot.lane.b32.xlu0 %v1117, 120
  %v1137 = vpop.permute.xlu0 %1136
  %v1138 = vmul.f32 %v1137, %v1049
  %1139 = vrot.lane.b32.xlu0 %v1117, 119
  %v1140 = vpop.permute.xlu0 %1139
  %v1141 = vmul.f32 %v1140, %v1057
  %v1142 = vpack.c.bf16 %v1123, %v1120
  %v1143 = vpack.c.bf16 %v1129, %v1126
  %v1144 = vpack.c.bf16 %v1132, %v1117
  %v1145 = vpack.c.bf16 %v1138, %v1135
  %v1146 = vpack.c.bf16 0.0, %v1141
  %1147 = vmatprep.subr.bf16.mxu0 0
  %1148 = vmatpush1.bf16.msra.mxu0 %v1142
  %1149 = vmatprep.subr.bf16.mxu0 0
  %1150 = vmatpush1.bf16.msra.mxu0 %v1143
  %1151 = vmatprep.subr.bf16.mxu0 0
  %1152 = vmatpush1.bf16.msra.mxu0 %v1144
  %1153 = vmatprep.subr.bf16.mxu0 0
  %1154 = vmatpush1.bf16.msra.mxu0 %v1145
  %1155 = vmatprep.subr.bf16.mxu0 0
  %1156 = vmatpush1.bf16.msra.mxu0 %v1146
  %1157 = vmatprep.subr.bf16.mxu0 0
  %1158 = vmatpush1.bf16.msra.mxu0 0
  %1159 = vmatprep.subr.bf16.mxu0 0
  %1160 = vmatpush1.bf16.msra.mxu0 0
  %1161 = vmatprep.subr.bf16.mxu0 0
  %1162 = vmatpush1.bf16.msra.mxu0 0
  %1163 = vmatprep.subr.bf16.mxu0 0
  %1164 = vmatpush1.bf16.msra.mxu0 0
  %1165 = vmatprep.subr.bf16.mxu0 0
  %1166 = vmatpush1.bf16.msra.mxu0 0
  %1167 = vmatprep.subr.bf16.mxu0 0
  %1168 = vmatpush1.bf16.msra.mxu0 0
  %1169 = vmatprep.subr.bf16.mxu0 0
  %1170 = vmatpush1.bf16.msra.mxu0 0
  %1171 = vmatprep.subr.bf16.mxu0 0
  %1172 = vmatpush1.bf16.msra.mxu0 0
  %1173 = vmatprep.subr.bf16.mxu0 0
  %1174 = vmatpush1.bf16.msra.mxu0 0
  %1175 = vmatprep.subr.bf16.mxu0 0
  %1176 = vmatpush1.bf16.msra.mxu0 0
  %1177 = vmatprep.subr.bf16.mxu0 0
  %1178 = vmatpush1.bf16.msra.mxu0 0
  %1179 = vmatprep.mubr.bf16.mxu0 0
  %1180 = vmatmul.mubr.bf16.gmra.mrb[0].mxu0 %v1073
  %v1181 = vpop.f32.mrb[0].mxu0
  %v1182 = vadd.f32 0.0, %v1181
  %v1183 = vpop.f32.mrb[0].mxu0
  %v1184 = vpop.f32.mrb[0].mxu0
  %v1185 = vpop.f32.mrb[0].mxu0
  %1186 = vdwg.mxu0
  %v1187 = vadd.f32 %v1182, %v1115
  %1188 = vst [vmem:[%s19] sm:$0xff] %v1187
  // Predicated region
  $region78: #{attn_decoder_forward.1} parent=0 // pred_check
    _
  $region79: #{attn_decoder_forward.1} parent=0 // pred_check_branch
    %1190 = sbr.rel (0) target = $region81
  $region80: #{attn_decoder_forward.1} parent=0 // pred_region
    _
  $region81: #{attn_decoder_forward.1} parent=0 // pred_fallthru
    _
  // Predicated region
  $region82: #{attn_decoder_forward.1} parent=0 // pred_check
    _
  $region83: #{attn_decoder_forward.1} parent=0 // pred_check_branch
    %1192 = sbr.rel (0) target = $region85
  $region84: #{attn_decoder_forward.1} parent=0 // pred_region
    _
  $region85: #{attn_decoder_forward.1} parent=0 // pred_fallthru
    _
  // Predicated region
  $region86: #{attn_decoder_forward.1} parent=0 // pred_check
    _
  $region87: #{attn_decoder_forward.1} parent=0 // pred_check_branch
    %1194 = sbr.rel (0) target = $region89
  $region88: #{attn_decoder_forward.1} parent=0 // pred_region
    _
  $region89: #{attn_decoder_forward.1} parent=0 // pred_fallthru
    _
  // Predicated region
  $region90: #{attn_decoder_forward.1} parent=0 // pred_check
    _
  $region91: #{attn_decoder_forward.1} parent=0 // pred_check_branch
    %1196 = sbr.rel (0) target = $region93
  $region92: #{attn_decoder_forward.1} parent=0 // pred_region
    _
  $region93: #{attn_decoder_forward.1} parent=0 // pred_fallthru
    _
  // Predicated region
  $region94: #{attn_decoder_forward.1} parent=0 // pred_check
    _
  $region95: #{attn_decoder_forward.1} parent=0 // pred_check_branch
    %1198 = sbr.rel (0) target = $region97
  $region96: #{attn_decoder_forward.1} parent=0 // pred_region
    _
  $region97: #{attn_decoder_forward.1} parent=0 // pred_fallthru
    _
  // Predicated region
  $region98: #{attn_decoder_forward.1} parent=0 // pred_check
    _
  $region99: #{attn_decoder_forward.1} parent=0 // pred_check_branch
    %1200 = sbr.rel (0) target = $region101
  $region100: #{attn_decoder_forward.1} parent=0 // pred_region
    _
  $region101: #{attn_decoder_forward.1} parent=0 // pred_fallthru
    _
  // Predicated region
  $region102: #{attn_decoder_forward.1} parent=0 // pred_check
    _
  $region103: #{attn_decoder_forward.1} parent=0 // pred_check_branch
    %1202 = sbr.rel (0) target = $region105
  $region104: #{attn_decoder_forward.1} parent=0 // pred_region
    _
  $region105: #{attn_decoder_forward.1} parent=0 // pred_fallthru
    _
  // Predicated region
  $region106: #{attn_decoder_forward.1} parent=0 // pred_check
    _
  $region107: #{attn_decoder_forward.1} parent=0 // pred_check_branch
    %1204 = sbr.rel (0) target = $region109
  $region108: #{attn_decoder_forward.1} parent=0 // pred_region
    _
  $region109: #{attn_decoder_forward.1} parent=0 // pred_fallthru
    _

</llo_original>
